<compile_context>
chip_gen: v7x
topology: tpu7x:2x2x1
jax: 0.10.0
libtpu: 0.0.40
codegen_flags: <defaults>
</compile_context>

<pallas_src>
import functools

import numpy as np
import jax
import jax.numpy as jnp
from jax.experimental import pallas as pl
from jax.experimental.pallas import tpu as pltpu


def _truss_kernel(inp_ref, enc_ref, wpack_ref, vpack_ref, out_ref, *,
                  wlayout, vlayout):
    """Per-batch forward.  Layout: channels on sublanes, points (P) on lanes.

    inp_ref  : (A, P)  f32   one batch's points, features on sublanes
    enc_ref  : (1, L)  f32   one batch's encoder state
    wpack_ref: (R, W)  bf16  all matmul weights, 128-aligned lane offsets
    vpack_ref: (R, 8)  f32   biases + folded conv7 projection (columns)
    out_ref  : (1, P)  f32   this batch's log-softmax scores
    """
    f32 = jnp.float32

    def wsl(name):
        rows, c0, c1 = wlayout[name]
        return wpack_ref[:rows, c0:c1]                       # bf16 (rows, cin)

    def vcol(name):
        rows, c = vlayout[name]
        return vpack_ref[:rows, c:c + 1]                     # f32 (rows, 1)

    def mm(w, act):
        # MXU matmul: bf16 operands, f32 accumulation.
        return jnp.dot(w, act.astype(w.dtype), preferred_element_type=f32)

    def relu(t):
        return jnp.maximum(t, 0.0)

    inp = inp_ref[...]                                       # (A, P) f32

    # fused conv1+bn1 / conv2+bn2: one block-diagonal (128, A) matmul.
    a = relu(mm(wsl("w12"), inp) + vcol("b12"))              # (128, P)
    x = a[:64, :]                                            # conv1 branch
    y = a[64:, :]                                            # conv2 branch
    # convc x-contribution early (feedback #7): x dead before the 256-ch stage.
    zx = mm(wsl("wcx"), x)                                   # (L, P)

    y = relu(mm(wsl("w3"), y) + vcol("b3"))                  # conv3+bn3 (128, P)
    y = relu(mm(wsl("w5"), y) + vcol("b5"))                  # conv5+bn5 (256, P)
    z = relu(zx + mm(wsl("wcy"), y) + vcol("bc"))            # convc+bnc (L, P)

    # conv6's enc-state half, in-kernel (feedback #1), kept in f32:
    #   enc_col[c] = sum_i w6e[c, i] * enc_state[b, i]
    enc_row = enc_ref[...]                                   # (1, L) f32
    enc_col = jnp.sum(wsl("w6e").astype(f32) * enc_row,
                      axis=1, keepdims=True)                 # (128, 1)
    h = relu(mm(wsl("w6z"), z) + enc_col + vcol("b6"))       # conv6+bn6 (128, P)

    # conv7 + AvgPool1d(32) folded to 128 -> 1; f32 weighted sublane reduction
    # on the VPU/XLU instead of an M=1 MXU matmul (feedback #8).
    scores = jnp.sum(h * vcol("w7m"), axis=0, keepdims=True) + vcol("b7m")  # (1,P)

    # mask points whose first three (xyz) features sum to exactly zero.
    coord_sum = jnp.sum(inp[0:3, :], axis=0, keepdims=True)  # (1, P)
    scores = jnp.where(coord_sum == 0.0, jnp.float32(-1e8), scores)

    # per-batch log_softmax over the point (lane) axis; one full-block store.
    m = jnp.max(scores, axis=1, keepdims=True)
    sh = scores - m
    lse = jnp.log(jnp.sum(jnp.exp(sh), axis=1, keepdims=True))
    out_ref[...] = sh - lse


def make_truss_sel_forward(kp):
    """Build a jitted forward closed over the static packing layout."""
    wlayout = kp["wlayout"]
    vlayout = kp["vlayout"]
    latent = kp["latent"]
    kernel = functools.partial(_truss_kernel, wlayout=wlayout, vlayout=vlayout)

    @jax.jit
    def fwd(enc_state, inp, wpack, vpack):
        B, P, A = inp.shape
        inp_t = jnp.transpose(inp, (0, 2, 1))                # (B, A, P)
        enc3 = enc_state.reshape(B, 1, latent)               # (B, 1, L)
        out = pl.pallas_call(
            kernel,
            out_shape=jax.ShapeDtypeStruct((B, 1, P), jnp.float32),
            grid=(B,),
            in_specs=[
                pl.BlockSpec((None, A, P), lambda b: (b, 0, 0)),       # per-batch inp
                pl.BlockSpec((None, 1, latent), lambda b: (b, 0, 0)),  # per-batch enc
                pl.BlockSpec(wpack.shape, lambda b: (0, 0)),           # resident weights
                pl.BlockSpec(vpack.shape, lambda b: (0, 0)),           # resident biases
            ],
            out_specs=pl.BlockSpec((None, 1, P), lambda b: (b, 0, 0)),
            compiler_params=pltpu.CompilerParams(
                dimension_semantics=("parallel",)),          # v7x: both TensorCores
        )(inp_t, enc3, wpack, vpack)
        return out.reshape(B, P)

    return fwd


def init_raw_params(key, latent=128, act_size=7):
    """Deterministic synthetic weights in the PyTorch (Cout, Cin) layout + BN stats."""
    keys = iter(jax.random.split(key, 48))

    def conv(cout, cin, scale=0.1):
        w = scale * jax.random.normal(next(keys), (cout, cin), jnp.float32)
        b = 0.1 * jax.random.normal(next(keys), (cout,), jnp.float32)
        return w, b

    def bn(c):
        gamma = 1.0 + 0.1 * jax.random.normal(next(keys), (c,), jnp.float32)
        beta = 0.05 * jax.random.normal(next(keys), (c,), jnp.float32)
        mean = 0.05 * jax.random.normal(next(keys), (c,), jnp.float32)
        var = 1.0 + 0.1 * jnp.abs(jax.random.normal(next(keys), (c,), jnp.float32))
        return gamma, beta, mean, var

    p = {}
    p["conv1"] = conv(64, 3);            p["bn1"] = bn(64)
    p["conv2"] = conv(64, act_size - 3); p["bn2"] = bn(64)
    p["conv3"] = conv(128, 64);          p["bn3"] = bn(128)
    p["conv5"] = conv(256, 128);         p["bn5"] = bn(256)
    p["convc"] = conv(latent, 64 + 256); p["bnc"] = bn(latent)
    p["conv6"] = conv(128, 2 * latent);  p["bn6"] = bn(128)
    p["conv7"] = conv(32, 128)           # bn7 exists in __init__ but is unused in forward
    return p


def prep_kernel_params(raw, latent=128, eps=1e-5, mxu_dtype=jnp.bfloat16):
    """Fold eval-mode BN into conv weights; fuse conv1/conv2; fold conv7+avgpool;
    pack weights into one bf16 array and bias/projection vectors into one f32
    array so the pallas_call takes only 4 inputs (feedback #2)."""
    def fold(conv_p, bn_p):
        w, b = conv_p
        gamma, beta, mean, var = bn_p
        s = gamma / jnp.sqrt(var + eps)
        return w * s[:, None], (b - mean) * s + beta

    w1, b1 = fold(raw["conv1"], raw["bn1"])
    w2, b2 = fold(raw["conv2"], raw["bn2"])
    w3, b3 = fold(raw["conv3"], raw["bn3"])
    w5, b5 = fold(raw["conv5"], raw["bn5"])
    wc, bc = fold(raw["convc"], raw["bnc"])
    w6, b6 = fold(raw["conv6"], raw["bn6"])
    w7, b7 = raw["conv7"]                      # bn7 intentionally omitted (unused)

    a_xyz = w1.shape[1]                        # 3
    A = a_xyz + w2.shape[1]                    # act_size
    # fused conv1/conv2 block-diagonal weight: (128, A).
    w12 = jnp.zeros((128, A), jnp.float32)
    w12 = w12.at[:64, :a_xyz].set(w1)
    w12 = w12.at[64:, a_xyz:].set(w2)
    b12 = jnp.concatenate([b1, b2])

    wcx, wcy = wc[:, :64], wc[:, 64:]          # convc split: x-branch / y-branch
    w6z, w6e = w6[:, :latent], w6[:, latent:]  # conv6 split: z-part / enc-part

    # conv7 + AvgPool1d(32) folded into one 128 -> 1 projection (f32 in-kernel).
    w7m = jnp.mean(w7, axis=0)                 # (128,)
    b7m = jnp.mean(b7).reshape(1)              # (1,)

    # ---- weight pack (bf16), every weight at a 128-aligned lane offset ----
    def ceil128(n):
        return ((n + 127) // 128) * 128

    named_w = [("w12", w12), ("w3", w3), ("wcx", wcx), ("w6z", w6z),
               ("w6e", w6e), ("w5", w5), ("wcy", wcy)]
    rows = max(int(w.shape[0]) for _, w in named_w)
    rows = ((rows + 7) // 8) * 8
    cols = sum(ceil128(int(w.shape[1])) for _, w in named_w)
    wpack = jnp.zeros((rows, cols), mxu_dtype)
    wlayout = {}
    off = 0
    for name, w in named_w:
        r, c = int(w.shape[0]), int(w.shape[1])
        wpack = wpack.at[:r, off:off + c].set(w.astype(mxu_dtype))
        wlayout[name] = (r, off, off + c)
        off += ceil128(c)

    # ---- small-vector pack (f32): biases as columns + folded conv7 weights ----
    named_v = [("b12", b12), ("b3", b3), ("b5", b5), ("bc", bc),
               ("b6", b6), ("b7m", b7m), ("w7m", w7m)]
    vpack = jnp.zeros((rows, 8), jnp.float32)
    vlayout = {}
    for j, (name, v) in enumerate(named_v):
        n = int(v.shape[0])
        vpack = vpack.at[:n, j].set(v.astype(jnp.float32))
        vlayout[name] = (n, j)

    return dict(wpack=wpack, vpack=vpack, wlayout=wlayout, vlayout=vlayout,
                act_size=A, latent=latent)


def reference_forward(enc_state, inp, raw, eps=1e-5):
    """Plain-JAX, full-f32, unfused reference matching the PyTorch forward."""
    def conv_bn_relu(x, conv_p, bn_p):
        w, b = conv_p
        gamma, beta, mean, var = bn_p
        y = x @ w.T + b
        y = (y - mean) / jnp.sqrt(var + eps) * gamma + beta
        return jax.nn.relu(y)

    B, P, _ = inp.shape
    xyz = inp[:, :, :3]
    rest = inp[:, :, 3:]
    x = conv_bn_relu(xyz, raw["conv1"], raw["bn1"])
    y = conv_bn_relu(rest, raw["conv2"], raw["bn2"])
    y = conv_bn_relu(y, raw["conv3"], raw["bn3"])
    y = conv_bn_relu(y, raw["conv5"], raw["bn5"])
    z = conv_bn_relu(jnp.concatenate([x, y], axis=-1), raw["convc"], raw["bnc"])
    enc_rep = jnp.broadcast_to(enc_state[:, None, :], (B, P, enc_state.shape[1]))
    w = conv_bn_relu(jnp.concatenate([z, enc_rep], axis=-1), raw["conv6"], raw["bn6"])
    w7, b7 = raw["conv7"]
    h = w @ w7.T + b7
    scores = jnp.mean(h, axis=-1)                       # AvgPool1d(32)
    scores = jnp.where(jnp.sum(xyz, axis=-1) == 0.0, -1e8, scores)
    return jax.nn.log_softmax(scores, axis=1)


if __name__ == "__main__":
    # batch=2, n_pts=64, act_size=7 (priority=False), latent_size=128 (small shapes)
    B, P, A, L = 2, 64, 7, 128
    key = jax.random.PRNGKey(0)
    kparam_key, kenc, kx = jax.random.split(key, 3)

    raw = init_raw_params(kparam_key, latent=L, act_size=A)
    kp = prep_kernel_params(raw, latent=L)
    fwd = make_truss_sel_forward(kp)

    enc_state = jax.random.normal(kenc, (B, L), jnp.float32)
    inp = jax.random.normal(kx, (B, P, A), jnp.float32)
    # zero a few points' coordinate features to exercise the masking branch
    inp = inp.at[0, 5, :3].set(0.0)
    inp = inp.at[1, 10:13, :3].set(0.0)

    out = fwd(enc_state, inp, kp["wpack"], kp["vpack"])
    out = jax.block_until_ready(out)

    ref = reference_forward(enc_state, inp, raw)
    assert out.shape == (B, P)
    np.testing.assert_allclose(np.asarray(out), np.asarray(ref), rtol=3e-2, atol=3e-2)
    print("KERNEL_OK")
</pallas_src>

<mosaic_0001>
module attributes {stable_mosaic.version = 11 : i64} {
  func.func @_truss_kernel(%arg0: i32, %arg1: memref<1x7x64xf32, #tpu.memory_space<vmem>>, %arg2: memref<1x1x128xf32, #tpu.memory_space<vmem>>, %arg3: memref<256x1024xbf16, #tpu.memory_space<vmem>>, %arg4: memref<256x8xf32, #tpu.memory_space<vmem>>, %arg5: memref<1x1x64xf32, #tpu.memory_space<vmem>>) attributes {dimension_semantics = [#tpu.dimension_semantics<parallel>], iteration_bounds = array<i64: 2>, scalar_prefetch = 0 : i64, scratch_operands = 0 : i64, tpu.core_type = #tpu.core_type<tc>, window_params = [{transform_indices = @transform_0, window_bounds = array<i64: 1, 7, 64>}, {transform_indices = @transform_1, window_bounds = array<i64: 1, 1, 128>}, {pipeline_mode = #tpu.pipeline_mode<synchronous>, transform_indices = @transform_2, window_bounds = array<i64: 256, 1024>}, {pipeline_mode = #tpu.pipeline_mode<synchronous>, transform_indices = @transform_3, window_bounds = array<i64: 256, 8>}, {transform_indices = @transform_4, window_bounds = array<i64: 1, 1, 64>}]} {
    %c0 = arith.constant 0 : index
    %c0_0 = arith.constant 0 : index
    %c0_1 = arith.constant 0 : index
    %0 = vector.load %arg1[%c0, %c0_0, %c0_1] : memref<1x7x64xf32, #tpu.memory_space<vmem>>, vector<1x7x64xf32>
    %1 = vector.shape_cast %0 : vector<1x7x64xf32> to vector<7x64xf32>
    %c0_2 = arith.constant 0 : index
    %c0_3 = arith.constant 0 : index
    %2 = vector.load %arg3[%c0_2, %c0_3] : memref<256x1024xbf16, #tpu.memory_space<vmem>>, vector<128x7xbf16>
    %3 = arith.truncf %1 : vector<7x64xf32> to vector<7x64xbf16>
    %cst = arith.constant dense<0.000000e+00> : vector<128x64xf32>
    %4 = tpu.matmul %2, %3, %cst {dimension_numbers = #tpu.dot_dimension_numbers<[1], [0], [0], [1], [0, 0, 1, 1], [], []>} : vector<128x7xbf16>, vector<7x64xbf16>, vector<128x64xf32> -> vector<128x64xf32>
    %c0_4 = arith.constant 0 : index
    %c0_5 = arith.constant 0 : index
    %5 = vector.load %arg4[%c0_4, %c0_5] : memref<256x8xf32, #tpu.memory_space<vmem>>, vector<128x1xf32>
    %6 = vector.broadcast %5 : vector<128x1xf32> to vector<128x64xf32>
    %7 = arith.addf %4, %6 : vector<128x64xf32>
    %cst_6 = arith.constant 0.000000e+00 : f32
    %8 = vector.broadcast %cst_6 : f32 to vector<128x64xf32>
    %9 = arith.maximumf %7, %8 : vector<128x64xf32>
    %10 = vector.extract_strided_slice %9 {offsets = [0, 0], sizes = [64, 64], strides = [1, 1]} : vector<128x64xf32> to vector<64x64xf32>
    %11 = vector.extract_strided_slice %9 {offsets = [64, 0], sizes = [64, 64], strides = [1, 1]} : vector<128x64xf32> to vector<64x64xf32>
    %c0_7 = arith.constant 0 : index
    %c256 = arith.constant 256 : index
    %12 = vector.load %arg3[%c0_7, %c256] : memref<256x1024xbf16, #tpu.memory_space<vmem>>, vector<128x64xbf16>
    %13 = arith.truncf %10 : vector<64x64xf32> to vector<64x64xbf16>
    %cst_8 = arith.constant dense<0.000000e+00> : vector<128x64xf32>
    %14 = tpu.matmul %12, %13, %cst_8 {dimension_numbers = #tpu.dot_dimension_numbers<[1], [0], [0], [1], [0, 0, 1, 1], [], []>} : vector<128x64xbf16>, vector<64x64xbf16>, vector<128x64xf32> -> vector<128x64xf32>
    %c0_9 = arith.constant 0 : index
    %c128 = arith.constant 128 : index
    %15 = vector.load %arg3[%c0_9, %c128] : memref<256x1024xbf16, #tpu.memory_space<vmem>>, vector<128x64xbf16>
    %16 = arith.truncf %11 : vector<64x64xf32> to vector<64x64xbf16>
    %cst_10 = arith.constant dense<0.000000e+00> : vector<128x64xf32>
    %17 = tpu.matmul %15, %16, %cst_10 {dimension_numbers = #tpu.dot_dimension_numbers<[1], [0], [0], [1], [0, 0, 1, 1], [], []>} : vector<128x64xbf16>, vector<64x64xbf16>, vector<128x64xf32> -> vector<128x64xf32>
    %c0_11 = arith.constant 0 : index
    %c1 = arith.constant 1 : index
    %18 = vector.load %arg4[%c0_11, %c1] : memref<256x8xf32, #tpu.memory_space<vmem>>, vector<128x1xf32>
    %19 = vector.broadcast %18 : vector<128x1xf32> to vector<128x64xf32>
    %20 = arith.addf %17, %19 : vector<128x64xf32>
    %cst_12 = arith.constant 0.000000e+00 : f32
    %21 = vector.broadcast %cst_12 : f32 to vector<128x64xf32>
    %22 = arith.maximumf %20, %21 : vector<128x64xf32>
    %c0_13 = arith.constant 0 : index
    %c640 = arith.constant 640 : index
    %23 = vector.load %arg3[%c0_13, %c640] : memref<256x1024xbf16, #tpu.memory_space<vmem>>, vector<256x128xbf16>
    %24 = arith.truncf %22 : vector<128x64xf32> to vector<128x64xbf16>
    %cst_14 = arith.constant dense<0.000000e+00> : vector<256x64xf32>
    %25 = tpu.matmul %23, %24, %cst_14 {dimension_numbers = #tpu.dot_dimension_numbers<[1], [0], [0], [1], [0, 0, 1, 1], [], []>} : vector<256x128xbf16>, vector<128x64xbf16>, vector<256x64xf32> -> vector<256x64xf32>
    %c0_15 = arith.constant 0 : index
    %c2 = arith.constant 2 : index
    %26 = vector.load %arg4[%c0_15, %c2] : memref<256x8xf32, #tpu.memory_space<vmem>>, vector<256x1xf32>
    %27 = vector.broadcast %26 : vector<256x1xf32> to vector<256x64xf32>
    %28 = arith.addf %25, %27 : vector<256x64xf32>
    %cst_16 = arith.constant 0.000000e+00 : f32
    %29 = vector.broadcast %cst_16 : f32 to vector<256x64xf32>
    %30 = arith.maximumf %28, %29 : vector<256x64xf32>
    %c0_17 = arith.constant 0 : index
    %c768 = arith.constant 768 : index
    %31 = vector.load %arg3[%c0_17, %c768] : memref<256x1024xbf16, #tpu.memory_space<vmem>>, vector<128x256xbf16>
    %32 = arith.truncf %30 : vector<256x64xf32> to vector<256x64xbf16>
    %cst_18 = arith.constant dense<0.000000e+00> : vector<128x64xf32>
    %33 = tpu.matmul %31, %32, %cst_18 {dimension_numbers = #tpu.dot_dimension_numbers<[1], [0], [0], [1], [0, 0, 1, 1], [], []>} : vector<128x256xbf16>, vector<256x64xbf16>, vector<128x64xf32> -> vector<128x64xf32>
    %34 = arith.addf %14, %33 : vector<128x64xf32>
    %c0_19 = arith.constant 0 : index
    %c3 = arith.constant 3 : index
    %35 = vector.load %arg4[%c0_19, %c3] : memref<256x8xf32, #tpu.memory_space<vmem>>, vector<128x1xf32>
    %36 = vector.broadcast %35 : vector<128x1xf32> to vector<128x64xf32>
    %37 = arith.addf %34, %36 : vector<128x64xf32>
    %cst_20 = arith.constant 0.000000e+00 : f32
    %38 = vector.broadcast %cst_20 : f32 to vector<128x64xf32>
    %39 = arith.maximumf %37, %38 : vector<128x64xf32>
    %c0_21 = arith.constant 0 : index
    %c0_22 = arith.constant 0 : index
    %c0_23 = arith.constant 0 : index
    %40 = vector.load %arg2[%c0_21, %c0_22, %c0_23] : memref<1x1x128xf32, #tpu.memory_space<vmem>>, vector<1x1x128xf32>
    %41 = vector.shape_cast %40 : vector<1x1x128xf32> to vector<1x128xf32>
    %c0_24 = arith.constant 0 : index
    %c512 = arith.constant 512 : index
    %42 = vector.load %arg3[%c0_24, %c512] : memref<256x1024xbf16, #tpu.memory_space<vmem>>, vector<128x128xbf16>
    %43 = arith.extf %42 : vector<128x128xbf16> to vector<128x128xf32>
    %44 = vector.broadcast %41 : vector<1x128xf32> to vector<128x128xf32>
    %45 = arith.mulf %43, %44 : vector<128x128xf32>
    %cst_25 = arith.constant dense<0.000000e+00> : vector<128xf32>
    %46 = vector.multi_reduction <add>, %45, %cst_25 [1] : vector<128x128xf32> to vector<128xf32>
    %47 = vector.shape_cast %46 : vector<128xf32> to vector<128x1xf32>
    %c0_26 = arith.constant 0 : index
    %c384 = arith.constant 384 : index
    %48 = vector.load %arg3[%c0_26, %c384] : memref<256x1024xbf16, #tpu.memory_space<vmem>>, vector<128x128xbf16>
    %49 = arith.truncf %39 : vector<128x64xf32> to vector<128x64xbf16>
    %cst_27 = arith.constant dense<0.000000e+00> : vector<128x64xf32>
    %50 = tpu.matmul %48, %49, %cst_27 {dimension_numbers = #tpu.dot_dimension_numbers<[1], [0], [0], [1], [0, 0, 1, 1], [], []>} : vector<128x128xbf16>, vector<128x64xbf16>, vector<128x64xf32> -> vector<128x64xf32>
    %51 = vector.broadcast %47 : vector<128x1xf32> to vector<128x64xf32>
    %52 = arith.addf %50, %51 : vector<128x64xf32>
    %c0_28 = arith.constant 0 : index
    %c4 = arith.constant 4 : index
    %53 = vector.load %arg4[%c0_28, %c4] : memref<256x8xf32, #tpu.memory_space<vmem>>, vector<128x1xf32>
    %54 = vector.broadcast %53 : vector<128x1xf32> to vector<128x64xf32>
    %55 = arith.addf %52, %54 : vector<128x64xf32>
    %cst_29 = arith.constant 0.000000e+00 : f32
    %56 = vector.broadcast %cst_29 : f32 to vector<128x64xf32>
    %57 = arith.maximumf %55, %56 : vector<128x64xf32>
    %c0_30 = arith.constant 0 : index
    %c6 = arith.constant 6 : index
    %58 = vector.load %arg4[%c0_30, %c6] : memref<256x8xf32, #tpu.memory_space<vmem>>, vector<128x1xf32>
    %59 = vector.broadcast %58 : vector<128x1xf32> to vector<128x64xf32>
    %60 = arith.mulf %57, %59 : vector<128x64xf32>
    %cst_31 = arith.constant dense<0.000000e+00> : vector<64xf32>
    %61 = vector.multi_reduction <add>, %60, %cst_31 [0] : vector<128x64xf32> to vector<64xf32>
    %62 = vector.shape_cast %61 : vector<64xf32> to vector<1x64xf32>
    %c0_32 = arith.constant 0 : index
    %c5 = arith.constant 5 : index
    %63 = vector.load %arg4[%c0_32, %c5] : memref<256x8xf32, #tpu.memory_space<vmem>>, vector<1x1xf32>
    %64 = vector.broadcast %63 : vector<1x1xf32> to vector<1x64xf32>
    %65 = arith.addf %62, %64 : vector<1x64xf32>
    %66 = vector.extract_strided_slice %1 {offsets = [0, 0], sizes = [3, 64], strides = [1, 1]} : vector<7x64xf32> to vector<3x64xf32>
    %cst_33 = arith.constant dense<0.000000e+00> : vector<64xf32>
    %67 = vector.multi_reduction <add>, %66, %cst_33 [0] : vector<3x64xf32> to vector<64xf32>
    %68 = vector.shape_cast %67 : vector<64xf32> to vector<1x64xf32>
    %cst_34 = arith.constant 0.000000e+00 : f32
    %69 = vector.broadcast %cst_34 : f32 to vector<1x64xf32>
    %70 = arith.cmpf oeq, %68, %69 : vector<1x64xf32>
    %cst_35 = arith.constant -1.000000e+08 : f32
    %71 = vector.broadcast %cst_35 : f32 to vector<1x64xf32>
    %72 = arith.select %70, %71, %65 : vector<1x64xi1>, vector<1x64xf32>
    %cst_36 = arith.constant dense<0xFF800000> : vector<1xf32>
    %73 = vector.multi_reduction <maximumf>, %72, %cst_36 [1] : vector<1x64xf32> to vector<1xf32>
    %74 = vector.shape_cast %73 : vector<1xf32> to vector<1x1xf32>
    %75 = vector.broadcast %74 : vector<1x1xf32> to vector<1x64xf32>
    %76 = arith.subf %72, %75 : vector<1x64xf32>
    %77 = math.exp %76 : vector<1x64xf32>
    %cst_37 = arith.constant dense<0.000000e+00> : vector<1xf32>
    %78 = vector.multi_reduction <add>, %77, %cst_37 [1] : vector<1x64xf32> to vector<1xf32>
    %79 = vector.shape_cast %78 : vector<1xf32> to vector<1x1xf32>
    %80 = math.log %79 : vector<1x1xf32>
    %81 = vector.broadcast %80 : vector<1x1xf32> to vector<1x64xf32>
    %82 = arith.subf %76, %81 : vector<1x64xf32>
    %c0_38 = arith.constant 0 : index
    %c0_39 = arith.constant 0 : index
    %c0_40 = arith.constant 0 : index
    %83 = vector.load %arg5[%c0_38, %c0_39, %c0_40] : memref<1x1x64xf32, #tpu.memory_space<vmem>>, vector<1x1x64xf32>
    %84 = vector.shape_cast %83 : vector<1x1x64xf32> to vector<1x64xf32>
    %85 = vector.shape_cast %82 : vector<1x64xf32> to vector<1x1x64xf32>
    tpu.vector_store %arg5[%c0_38, %c0_39, %c0_40], %85 {strides = array<i32>} : memref<1x1x64xf32, #tpu.memory_space<vmem>>, vector<1x1x64xf32>,
    return
  }
  func.func @transform_0(%arg0: i32) -> (i32, i32, i32) {
    %c0_i32 = arith.constant 0 : i32
    %c0_i32_0 = arith.constant 0 : i32
    %c0_i32_1 = arith.constant 0 : i32
    return %arg0, %c0_i32, %c0_i32_0 : i32, i32, i32
  }
  func.func @transform_1(%arg0: i32) -> (i32, i32, i32) {
    %c0_i32 = arith.constant 0 : i32
    %c0_i32_0 = arith.constant 0 : i32
    %c0_i32_1 = arith.constant 0 : i32
    return %arg0, %c0_i32, %c0_i32_0 : i32, i32, i32
  }
  func.func @transform_2(%arg0: i32) -> (i32, i32) {
    %c0_i32 = arith.constant 0 : i32
    %c0_i32_0 = arith.constant 0 : i32
    %c0_i32_1 = arith.constant 0 : i32
    return %c0_i32, %c0_i32_0 : i32, i32
  }
  func.func @transform_3(%arg0: i32) -> (i32, i32) {
    %c0_i32 = arith.constant 0 : i32
    %c0_i32_0 = arith.constant 0 : i32
    %c0_i32_1 = arith.constant 0 : i32
    return %c0_i32, %c0_i32_0 : i32, i32
  }
  func.func @transform_4(%arg0: i32) -> (i32, i32, i32) {
    %c0_i32 = arith.constant 0 : i32
    %c0_i32_0 = arith.constant 0 : i32
    %c0_i32_1 = arith.constant 0 : i32
    return %arg0, %c0_i32, %c0_i32_0 : i32, i32, i32
  }
}

</mosaic_0001>

<llo_original>
// kernel: fwd.1
$region0: #{fwd.1}
  #allocation0 [shape = 'u32[]', space=smem, size = 0x4, offset = 0x4, fixed_abs, tag = 'smem constant byte address 0x4 - core index']
  #allocation1 [shape = 'u32[144,128]{1,0:T(1,128)}', space=vmem, size = 0x12000, scoped, tag = 'internal scratch']
  %s0 = inlined_call_operand.vmem [shape: f32[2,7,64], index: 0, kind: input, shape index: {}]
  %s1 = inlined_call_operand.vmem [shape: f32[2,1,128], index: 1, kind: input, shape index: {}]
  %s2 = inlined_call_operand.hbm [shape: bf16[256,1024], index: 2, kind: input, shape index: {}]
  %s3 = inlined_call_operand.vmem [shape: f32[256,8], index: 3, kind: input, shape index: {}]
  %s4 = inlined_call_operand.hbm [shape: f32[2,1,64], index: 4, kind: output, shape index: {}]
  %s5 = sld [smem:[#allocation0]]
  $region53: #{fwd.1} parent=0
    _
  %s7 = ssub.s32 1, %s5
  %s8 = scalar_select 0, %s7, %s5
  $region1: #{fwd.1} parent=0
    #allocation2 [shape = 'u8[524288]{0}', space=vmem, size = 0x80000, scoped, tag = 'input window, operand 2, single buffered']
    #allocation3 [shape = 's32[2]{0}', space=sflag, size = 0x8, scoped, tag = 'scoped memory for fwd.1']
    #allocation4 [shape = 's32[2]{0}', space=sflag, size = 0x8, scoped, tag = 'scoped memory for fwd.1']
    #allocation5 [shape = 'u8[1024]{0}', space=vmem, size = 0x400, scoped, tag = 'output window, operand 0']
    %9 = vsyncpa [#allocation3], 0
    %10 = vsyncpa [#allocation4], 0
    %s11 = scalar_lea.sflag [#allocation4], 1
    %12 = vsyncpa %s11, 0
    loop: start=0, step=1, limit=4
    $region2: #{fwd.1} parent=1 // loop_pre_header
      _
    $region3: #{fwd.1} parent=1 // loop_header
      %s14 = sphi 0, %s18
      %p15 = scmp.ge.s32.totalorder %s14, 4
      %s24 = sphi 0, %s26
      %s27 = sphi 0, %s24
      %s28 = sphi 0, %s27
      %s44 = sphi 0, %s28
      %s50 = sphi 0, %s52
      %s53 = sphi 0, %s50
      %s54 = sphi 0, %s53
      %s70 = sphi 0, %s54
      %s74 = sphi 0, %s74
      %s76 = sphi 0, %s74
      %s77 = sphi 0, %s76
      %s91 = sphi 0, %s77
      %s95 = sphi 0, %s95
      %s97 = sphi 0, %s95
      %s98 = sphi 0, %s97
      %s112 = sphi 0, %s98
      %s118 = sphi 0, %s120
      %s121 = sphi 0, %s118
      %s122 = sphi 0, %s121
      %s138 = sphi 0, %s122
    $region4: #{fwd.1} parent=1 // loop_header_branch
      %17 = sbr.rel (%p15) target = $region8
    $region5: #{fwd.1} parent=1 // loop_body
      %s19 = ssub.s32 %s14, 1
      %s20 = ssub.s32 %s14, 2
      %s21 = sadd.s32 %s14, 1
      %s22 = ssub.s32 %s14, %s21
      %p23 = scmp.eq.s32.totalorder %s22, 0
      %s25 = sadd.s32 %s24, 1
      %s26 = scalar_select %p23, %s24, %s25
      %p29 = pneg %p23
      %p30 = scmp.eq.s32.totalorder %s14, 1
      %p31 = por %p29, %p30
      %p32 = scmp.ne.s32.totalorder %s24, %s27
      %p33 = scmp.eq.s32.totalorder %s14, 0
      %p34 = por %p32, %p33
      %p35 = scmp.ne.s32.totalorder %s24, %s27
      %p36 = scmp.eq.s32.totalorder %s19, 1
      %p37 = por %p35, %p36
      %p38 = scmp.ne.s32.totalorder %s27, %s28
      %p39 = scmp.eq.s32.totalorder %s19, 0
      %p40 = por %p38, %p39
      %p41 = scmp.ne.s32.totalorder %s27, %s28
      %p42 = scmp.eq.s32.totalorder %s20, 1
      %p43 = por %p41, %p42
      %p45 = scmp.ne.s32.totalorder %s28, %s44
      %p46 = scmp.eq.s32.totalorder %s20, 0
      %p47 = por %p45, %p46
      %s48 = ssub.s32 %s14, %s21
      %p49 = scmp.eq.s32.totalorder %s48, 0
      %s51 = sadd.s32 %s50, 1
      %s52 = scalar_select %p49, %s50, %s51
      %p55 = pneg %p49
      %p56 = scmp.eq.s32.totalorder %s14, 1
      %p57 = por %p55, %p56
      %p58 = scmp.ne.s32.totalorder %s50, %s53
      %p59 = scmp.eq.s32.totalorder %s14, 0
      %p60 = por %p58, %p59
      %p61 = scmp.ne.s32.totalorder %s50, %s53
      %p62 = scmp.eq.s32.totalorder %s19, 1
      %p63 = por %p61, %p62
      %p64 = scmp.ne.s32.totalorder %s53, %s54
      %p65 = scmp.eq.s32.totalorder %s19, 0
      %p66 = por %p64, %p65
      %p67 = scmp.ne.s32.totalorder %s53, %s54
      %p68 = scmp.eq.s32.totalorder %s20, 1
      %p69 = por %p67, %p68
      %p71 = scmp.ne.s32.totalorder %s54, %s70
      %p72 = scmp.eq.s32.totalorder %s20, 0
      %p73 = por %p71, %p72
      %s75 = sadd.s32 %s74, 1
      %p78 = scmp.eq.s32.totalorder %s14, 1
      %p79 = scmp.ne.s32.totalorder %s74, %s76
      %p80 = scmp.eq.s32.totalorder %s14, 0
      %p81 = por %p79, %p80
      %p82 = scmp.ne.s32.totalorder %s74, %s76
      %p83 = scmp.eq.s32.totalorder %s19, 1
      %p84 = por %p82, %p83
      %p85 = scmp.ne.s32.totalorder %s76, %s77
      %p86 = scmp.eq.s32.totalorder %s19, 0
      %p87 = por %p85, %p86
      %p88 = scmp.ne.s32.totalorder %s76, %s77
      %p89 = scmp.eq.s32.totalorder %s20, 1
      %p90 = por %p88, %p89
      %p92 = scmp.ne.s32.totalorder %s77, %s91
      %p93 = scmp.eq.s32.totalorder %s20, 0
      %p94 = por %p92, %p93
      %s96 = sadd.s32 %s95, 1
      %p99 = scmp.eq.s32.totalorder %s14, 1
      %p100 = scmp.ne.s32.totalorder %s95, %s97
      %p101 = scmp.eq.s32.totalorder %s14, 0
      %p102 = por %p100, %p101
      %p103 = scmp.ne.s32.totalorder %s95, %s97
      %p104 = scmp.eq.s32.totalorder %s19, 1
      %p105 = por %p103, %p104
      %p106 = scmp.ne.s32.totalorder %s97, %s98
      %p107 = scmp.eq.s32.totalorder %s19, 0
      %p108 = por %p106, %p107
      %p109 = scmp.ne.s32.totalorder %s97, %s98
      %p110 = scmp.eq.s32.totalorder %s20, 1
      %p111 = por %p109, %p110
      %p113 = scmp.ne.s32.totalorder %s98, %s112
      %p114 = scmp.eq.s32.totalorder %s20, 0
      %p115 = por %p113, %p114
      %s116 = ssub.s32 %s14, %s21
      %p117 = scmp.eq.s32.totalorder %s116, 0
      %s119 = sadd.s32 %s118, 1
      %s120 = scalar_select %p117, %s118, %s119
      %p123 = pneg %p117
      %p124 = scmp.eq.s32.totalorder %s14, 1
      %p125 = por %p123, %p124
      %p126 = scmp.ne.s32.totalorder %s118, %s121
      %p127 = scmp.eq.s32.totalorder %s14, 0
      %p128 = por %p126, %p127
      %p129 = scmp.ne.s32.totalorder %s118, %s121
      %p130 = scmp.eq.s32.totalorder %s19, 1
      %p131 = por %p129, %p130
      %p132 = scmp.ne.s32.totalorder %s121, %s122
      %p133 = scmp.eq.s32.totalorder %s19, 0
      %p134 = por %p132, %p133
      %p135 = scmp.ne.s32.totalorder %s121, %s122
      %p136 = scmp.eq.s32.totalorder %s20, 1
      %p137 = por %p135, %p136
      %p139 = scmp.ne.s32.totalorder %s122, %s138
      %p140 = scmp.eq.s32.totalorder %s20, 0
      %p141 = por %p139, %p140
      %p142 = scmp.le.s32.totalorder 1, %s14
      %p143 = scmp.lt.s32.totalorder %s14, 3
      %p144 = pnand %p142, %p143
      %p145 = pneg %p144
      // Predicated region
      $region9: #{fwd.1} parent=5 // pred_check
        _
      $region10: #{fwd.1} parent=5 // pred_check_branch
        %147 = sbr.rel (%p144) target = $region12
      $region11: #{fwd.1} parent=5 // pred_region
        %s148 = ssub.s32 %s14, 1
        // Predicated region
        $region13: #{fwd.1} parent=11 // pred_check
          %p149 = pneg %p87
        $region14: #{fwd.1} parent=11 // pred_check_branch
          %151 = sbr.rel (%p149) target = $region16
        $region15: #{fwd.1} parent=11 // pred_region
          %s153 = ssub.s32 16384, 16384
          %154 = vsyncadd [#allocation3], %s153
          %s155 = sshll.u32 [#allocation2], 4
          %s156 = int_to_ptr.vmem [resolvable:$true] %s155
          %161 = dma.hbm_to_vmem [thread:$0]  %s2, 16384, %s156, [#allocation3], 512, 512, 32
        $region16: #{fwd.1} parent=11 // pred_fallthru
          _
        // Predicated region
        $region17: #{fwd.1} parent=11 // pred_check
          %p162 = pneg %p108
        $region18: #{fwd.1} parent=11 // pred_check_branch
          %164 = sbr.rel (%p162) target = $region20
        $region19: #{fwd.1} parent=11 // pred_region
          _
        $region20: #{fwd.1} parent=11 // pred_fallthru
          _
      $region12: #{fwd.1} parent=5 // pred_fallthru
        _
      %p165 = scmp.lt.s32.totalorder %s14, 2
      // Predicated region
      $region21: #{fwd.1} parent=5 // pred_check
        %p166 = pneg %p165
      $region22: #{fwd.1} parent=5 // pred_check_branch
        %168 = sbr.rel (%p166) target = $region24
      $region23: #{fwd.1} parent=5 // pred_region
        // Predicated region
        $region25: #{fwd.1} parent=23 // pred_check
          %p169 = pneg %p34
        $region26: #{fwd.1} parent=23 // pred_check_branch
          %171 = sbr.rel (%p169) target = $region28
        $region27: #{fwd.1} parent=23 // pred_region
          %p172 = scmp.lt.s32.totalorder %s14, 1
          %s173 = scalar_select %p172, %s14, 1
          %s174 = smul.addr %s173, 8
          %s175 = scalar_lea.vmem %s0, %s174
        $region28: #{fwd.1} parent=23 // pred_fallthru
          _
        // Predicated region
        $region29: #{fwd.1} parent=23 // pred_check
          %p176 = pneg %p60
        $region30: #{fwd.1} parent=23 // pred_check_branch
          %178 = sbr.rel (%p176) target = $region32
        $region31: #{fwd.1} parent=23 // pred_region
          %p179 = scmp.lt.s32.totalorder %s14, 1
          %s180 = scalar_select %p179, %s14, 1
          %s181 = scalar_lea.vmem %s1, %s180
        $region32: #{fwd.1} parent=23 // pred_fallthru
          _
      $region24: #{fwd.1} parent=5 // pred_fallthru
        _
      %p182 = scmp.le.s32.totalorder 1, %s14
      %p183 = scmp.lt.s32.totalorder %s14, 3
      %p184 = pnand %p182, %p183
      %p185 = pneg %p184
      // Predicated region
      $region33: #{fwd.1} parent=5 // pred_check
        _
      $region34: #{fwd.1} parent=5 // pred_check_branch
        %187 = sbr.rel (%p184) target = $region36
      $region35: #{fwd.1} parent=5 // pred_region
        %s188 = ssub.s32 %s14, 1
        // Predicated region
        $region37: #{fwd.1} parent=35 // pred_check
          %p189 = pneg %p87
        $region38: #{fwd.1} parent=35 // pred_check_branch
          %191 = sbr.rel (%p189) target = $region40
        $region39: #{fwd.1} parent=35 // pred_region
          %192 = dma.done [#allocation3], 16384
        $region40: #{fwd.1} parent=35 // pred_fallthru
          _
        %p193 = scmp.lt.s32.totalorder %s19, 1
        %s194 = scalar_select %p193, %s19, 1
        %s195 = smul.addr %s194, 8
        %s196 = scalar_lea.vmem %s0, %s195
        %p197 = pneg %p40
        %p198 = pneg %p37
        %p199 = scmp.lt.s32.totalorder %s19, 1
        %s200 = scalar_select %p199, %s19, 1
        %s201 = scalar_lea.vmem %s1, %s200
        %p202 = pneg %p66
        %p203 = pneg %p63
        %p204 = pneg %p87
        %p205 = pneg %p84
        %p206 = pneg %p108
        %p207 = pneg %p105
        %p208 = pneg %p134
        %p209 = pneg %p131
        %s210 = sand.u32 %s121, 1
        %s211 = scalar_lea.sflag [#allocation4], %s210
        %s212 = sand.u32 %s121, 1
        %s213 = scalar_lea.vmem [#allocation5], %s212
        %p214 = scmp.lt.s32.totalorder %s19, 1
        %s215 = scalar_select %p214, %s19, 1
        %s216 = smul.addr %s215, 8
        %s217 = scalar_lea.vmem %s0, %s216
        %p218 = scmp.lt.s32.totalorder %s19, 1
        %s219 = scalar_select %p218, %s19, 1
        %s220 = scalar_lea.vmem %s1, %s219
        %v222 = vld [vmem:[%s217] sm:$0x7f]
        %v223 = vld [vmem:[#allocation2] sm:$0xf]
        %v224 = vld [vmem:[#allocation2 + $0x20] sm:$0xf]
        %v225 = vld [vmem:[#allocation2 + $0x40] sm:$0xf]
        %v226 = vld [vmem:[#allocation2 + $0x60] sm:$0xf]
        %v227 = vld [vmem:[#allocation2 + $0x80] sm:$0xf]
        %v228 = vld [vmem:[#allocation2 + $0xa0] sm:$0xf]
        %v229 = vld [vmem:[#allocation2 + $0xc0] sm:$0xf]
        %v230 = vld [vmem:[#allocation2 + $0xe0] sm:$0xf]
        %v231 = vld [vmem:[#allocation2 + $0x100] sm:$0xf]
        %v232 = vld [vmem:[#allocation2 + $0x120] sm:$0xf]
        %v233 = vld [vmem:[#allocation2 + $0x140] sm:$0xf]
        %v234 = vld [vmem:[#allocation2 + $0x160] sm:$0xf]
        %v235 = vld [vmem:[#allocation2 + $0x180] sm:$0xf]
        %v236 = vld [vmem:[#allocation2 + $0x1a0] sm:$0xf]
        %v237 = vld [vmem:[#allocation2 + $0x1c0] sm:$0xf]
        %v238 = vld [vmem:[#allocation2 + $0x1e0] sm:$0xf]
        %v239 = vpack.c.bf16 %v222, %v222
        %v240 = vld [vmem:[%s3] sm:$0xff]
        %v241 = vld [vmem:[%s3 + $0x8] sm:$0xff]
        %v242 = vld [vmem:[%s3 + $0x10] sm:$0xff]
        %v243 = vld [vmem:[%s3 + $0x18] sm:$0xff]
        %v244 = vld [vmem:[%s3 + $0x20] sm:$0xff]
        %v245 = vld [vmem:[%s3 + $0x28] sm:$0xff]
        %v246 = vld [vmem:[%s3 + $0x30] sm:$0xff]
        %v247 = vld [vmem:[%s3 + $0x38] sm:$0xff]
        %v248 = vld [vmem:[%s3 + $0x40] sm:$0xff]
        %v249 = vld [vmem:[%s3 + $0x48] sm:$0xff]
        %v250 = vld [vmem:[%s3 + $0x50] sm:$0xff]
        %v251 = vld [vmem:[%s3 + $0x58] sm:$0xff]
        %v252 = vld [vmem:[%s3 + $0x60] sm:$0xff]
        %v253 = vld [vmem:[%s3 + $0x68] sm:$0xff]
        %v254 = vld [vmem:[%s3 + $0x70] sm:$0xff]
        %v255 = vld [vmem:[%s3 + $0x78] sm:$0xff]
        %257 = vset.pattern.permute.xlu0 0
        %258 = vperm.xlu0 %257, %v240
        %v259 = vpop.permute.xlu0 %258
        %262 = vset.pattern.permute.xlu0 0
        %263 = vperm.xlu0 %262, %v241
        %v264 = vpop.permute.xlu0 %263
        %267 = vset.pattern.permute.xlu0 0
        %268 = vperm.xlu0 %267, %v242
        %v269 = vpop.permute.xlu0 %268
        %272 = vset.pattern.permute.xlu0 0
        %273 = vperm.xlu0 %272, %v243
        %v274 = vpop.permute.xlu0 %273
        %277 = vset.pattern.permute.xlu0 0
        %278 = vperm.xlu0 %277, %v244
        %v279 = vpop.permute.xlu0 %278
        %282 = vset.pattern.permute.xlu0 0
        %283 = vperm.xlu0 %282, %v245
        %v284 = vpop.permute.xlu0 %283
        %287 = vset.pattern.permute.xlu0 0
        %288 = vperm.xlu0 %287, %v246
        %v289 = vpop.permute.xlu0 %288
        %292 = vset.pattern.permute.xlu0 0
        %293 = vperm.xlu0 %292, %v247
        %v294 = vpop.permute.xlu0 %293
        %297 = vset.pattern.permute.xlu0 0
        %298 = vperm.xlu0 %297, %v248
        %v299 = vpop.permute.xlu0 %298
        %302 = vset.pattern.permute.xlu0 0
        %303 = vperm.xlu0 %302, %v249
        %v304 = vpop.permute.xlu0 %303
        %307 = vset.pattern.permute.xlu0 0
        %308 = vperm.xlu0 %307, %v250
        %v309 = vpop.permute.xlu0 %308
        %312 = vset.pattern.permute.xlu0 0
        %313 = vperm.xlu0 %312, %v251
        %v314 = vpop.permute.xlu0 %313
        %317 = vset.pattern.permute.xlu0 0
        %318 = vperm.xlu0 %317, %v252
        %v319 = vpop.permute.xlu0 %318
        %322 = vset.pattern.permute.xlu0 0
        %323 = vperm.xlu0 %322, %v253
        %v324 = vpop.permute.xlu0 %323
        %327 = vset.pattern.permute.xlu0 0
        %328 = vperm.xlu0 %327, %v254
        %v329 = vpop.permute.xlu0 %328
        %332 = vset.pattern.permute.xlu0 0
        %333 = vperm.xlu0 %332, %v255
        %v334 = vpop.permute.xlu0 %333
        %v352 = vunpack.c.l.b16 %v223
        %v353 = vunpack.c.l.b16 %v224
        %v354 = vunpack.c.l.b16 %v225
        %v355 = vunpack.c.l.b16 %v226
        %v356 = vunpack.c.l.b16 %v227
        %v357 = vunpack.c.l.b16 %v228
        %v358 = vunpack.c.l.b16 %v229
        %v359 = vunpack.c.l.b16 %v230
        %v360 = vunpack.c.l.b16 %v231
        %v361 = vunpack.c.l.b16 %v232
        %v362 = vunpack.c.l.b16 %v233
        %v363 = vunpack.c.l.b16 %v234
        %v364 = vunpack.c.l.b16 %v235
        %v365 = vunpack.c.l.b16 %v236
        %v366 = vunpack.c.l.b16 %v237
        %v367 = vunpack.c.l.b16 %v238
        %v368 = vpack.c.b16 %v353, %v352
        %v369 = vpack.c.b16 %v355, %v354
        %v370 = vpack.c.b16 %v357, %v356
        %v371 = vpack.c.b16 %v359, %v358
        %v372 = vpack.c.b16 %v361, %v360
        %v373 = vpack.c.b16 %v363, %v362
        %v374 = vpack.c.b16 %v365, %v364
        %v375 = vpack.c.b16 %v367, %v366
        %vm376 = vcmask 56320
        %v378 = vsel %vm376, %v368, 0
        %v381 = vsel %vm376, %v369, 0
        %v384 = vsel %vm376, %v370, 0
        %v387 = vsel %vm376, %v371, 0
        %v390 = vsel %vm376, %v372, 0
        %v393 = vsel %vm376, %v373, 0
        %v396 = vsel %vm376, %v374, 0
        %v399 = vsel %vm376, %v375, 0
        %vm401 = vcmask 1042432
        %vm402 = vcmask 1043456
        %v403 = vsel %vm401, 4294967295, 65535
        %v404 = vsel %vm402, %v403, 0
        %v406 = vand.u32 %v239, %v404
        %408 = vmatprep.subr.bf16.mxu0 0
        %409 = vmatpush1.bf16.msra.mxu0 %v406
        %410 = vmatprep.subr.bf16.mxu0 0
        %411 = vmatpush1.bf16.msra.mxu0 0
        %412 = vmatprep.subr.bf16.mxu0 0
        %413 = vmatpush1.bf16.msra.mxu0 0
        %414 = vmatprep.subr.bf16.mxu0 0
        %415 = vmatpush1.bf16.msra.mxu0 0
        %416 = vmatprep.subr.bf16.mxu0 0
        %417 = vmatpush1.bf16.msra.mxu0 0
        %418 = vmatprep.subr.bf16.mxu0 0
        %419 = vmatpush1.bf16.msra.mxu0 0
        %420 = vmatprep.subr.bf16.mxu0 0
        %421 = vmatpush1.bf16.msra.mxu0 0
        %422 = vmatprep.subr.bf16.mxu0 0
        %423 = vmatpush1.bf16.msra.mxu0 0
        %424 = vmatprep.subr.bf16.mxu0 0
        %425 = vmatpush1.bf16.msra.mxu0 0
        %426 = vmatprep.subr.bf16.mxu0 0
        %427 = vmatpush1.bf16.msra.mxu0 0
        %428 = vmatprep.subr.bf16.mxu0 0
        %429 = vmatpush1.bf16.msra.mxu0 0
        %430 = vmatprep.subr.bf16.mxu0 0
        %431 = vmatpush1.bf16.msra.mxu0 0
        %432 = vmatprep.subr.bf16.mxu0 0
        %433 = vmatpush1.bf16.msra.mxu0 0
        %434 = vmatprep.subr.bf16.mxu0 0
        %435 = vmatpush1.bf16.msra.mxu0 0
        %436 = vmatprep.subr.bf16.mxu0 0
        %437 = vmatpush1.bf16.msra.mxu0 0
        %438 = vmatprep.subr.bf16.mxu0 0
        %439 = vmatpush1.bf16.msra.mxu0 0
        %440 = vmatprep.mubr.bf16.mxu0 0
        %441 = vmatmul.mubr.bf16.gmra.mrb[0].mxu0 %v378
        %v442 = vpop.f32.mrb[0].mxu0
        %v443 = vadd.f32 %v259, %v442
        %v444 = vpop.f32.mrb[0].mxu0
        %v445 = vpop.f32.mrb[0].mxu0
        %v446 = vadd.f32 %v264, %v445
        %v447 = vpop.f32.mrb[0].mxu0
        %448 = vmatprep.mubr.bf16.mxu0 0
        %449 = vmatmul.mubr.bf16.gmra.mrb[0].mxu0 %v381
        %v450 = vpop.f32.mrb[0].mxu0
        %v451 = vadd.f32 %v269, %v450
        %v452 = vpop.f32.mrb[0].mxu0
        %v453 = vpop.f32.mrb[0].mxu0
        %v454 = vadd.f32 %v274, %v453
        %v455 = vpop.f32.mrb[0].mxu0
        %456 = vmatprep.mubr.bf16.mxu0 0
        %457 = vmatmul.mubr.bf16.gmra.mrb[0].mxu0 %v384
        %v458 = vpop.f32.mrb[0].mxu0
        %v459 = vadd.f32 %v279, %v458
        %v460 = vpop.f32.mrb[0].mxu0
        %v461 = vpop.f32.mrb[0].mxu0
        %v462 = vadd.f32 %v284, %v461
        %v463 = vpop.f32.mrb[0].mxu0
        %464 = vmatprep.mubr.bf16.mxu0 0
        %465 = vmatmul.mubr.bf16.gmra.mrb[0].mxu0 %v387
        %v466 = vpop.f32.mrb[0].mxu0
        %v467 = vadd.f32 %v289, %v466
        %v468 = vpop.f32.mrb[0].mxu0
        %v469 = vpop.f32.mrb[0].mxu0
        %v470 = vadd.f32 %v294, %v469
        %v471 = vpop.f32.mrb[0].mxu0
        %472 = vmatprep.mubr.bf16.mxu0 0
        %473 = vmatmul.mubr.bf16.gmra.mrb[0].mxu0 %v390
        %v474 = vpop.f32.mrb[0].mxu0
        %v475 = vadd.f32 %v299, %v474
        %v476 = vpop.f32.mrb[0].mxu0
        %v477 = vpop.f32.mrb[0].mxu0
        %v478 = vadd.f32 %v304, %v477
        %v479 = vpop.f32.mrb[0].mxu0
        %480 = vmatprep.mubr.bf16.mxu0 0
        %481 = vmatmul.mubr.bf16.gmra.mrb[0].mxu0 %v393
        %v482 = vpop.f32.mrb[0].mxu0
        %v483 = vadd.f32 %v309, %v482
        %v484 = vpop.f32.mrb[0].mxu0
        %v485 = vpop.f32.mrb[0].mxu0
        %v486 = vadd.f32 %v314, %v485
        %v487 = vpop.f32.mrb[0].mxu0
        %488 = vmatprep.mubr.bf16.mxu0 0
        %489 = vmatmul.mubr.bf16.gmra.mrb[0].mxu0 %v396
        %v490 = vpop.f32.mrb[0].mxu0
        %v491 = vadd.f32 %v319, %v490
        %v492 = vpop.f32.mrb[0].mxu0
        %v493 = vpop.f32.mrb[0].mxu0
        %v494 = vadd.f32 %v324, %v493
        %v495 = vpop.f32.mrb[0].mxu0
        %496 = vmatprep.mubr.bf16.mxu0 0
        %497 = vmatmul.mubr.bf16.gmra.mrb[0].mxu0 %v399
        %v498 = vpop.f32.mrb[0].mxu0
        %v499 = vadd.f32 %v329, %v498
        %v500 = vpop.f32.mrb[0].mxu0
        %v501 = vpop.f32.mrb[0].mxu0
        %v502 = vadd.f32 %v334, %v501
        %v503 = vpop.f32.mrb[0].mxu0
        %504 = vdwg.mxu0
        %v505 = vmax.f32 %v443, 0.0
        %v506 = vmax.f32 %v446, 0.0
        %v507 = vmax.f32 %v451, 0.0
        %v508 = vmax.f32 %v454, 0.0
        %v509 = vmax.f32 %v459, 0.0
        %v510 = vmax.f32 %v462, 0.0
        %v511 = vmax.f32 %v467, 0.0
        %v512 = vmax.f32 %v470, 0.0
        %v513 = vmax.f32 %v475, 0.0
        %v514 = vmax.f32 %v478, 0.0
        %v515 = vmax.f32 %v483, 0.0
        %v516 = vmax.f32 %v486, 0.0
        %v517 = vmax.f32 %v491, 0.0
        %v518 = vmax.f32 %v494, 0.0
        %v519 = vmax.f32 %v499, 0.0
        %v520 = vmax.f32 %v502, 0.0
        %v521 = vld [vmem:[#allocation2 + $0x8] sm:$0xf]
        %v522 = vld [vmem:[#allocation2 + $0x28] sm:$0xf]
        %v523 = vld [vmem:[#allocation2 + $0x48] sm:$0xf]
        %v524 = vld [vmem:[#allocation2 + $0x68] sm:$0xf]
        %v525 = vld [vmem:[#allocation2 + $0x88] sm:$0xf]
        %v526 = vld [vmem:[#allocation2 + $0xa8] sm:$0xf]
        %v527 = vld [vmem:[#allocation2 + $0xc8] sm:$0xf]
        %v528 = vld [vmem:[#allocation2 + $0xe8] sm:$0xf]
        %v529 = vld [vmem:[#allocation2 + $0x108] sm:$0xf]
        %v530 = vld [vmem:[#allocation2 + $0x128] sm:$0xf]
        %v531 = vld [vmem:[#allocation2 + $0x148] sm:$0xf]
        %v532 = vld [vmem:[#allocation2 + $0x168] sm:$0xf]
        %v533 = vld [vmem:[#allocation2 + $0x188] sm:$0xf]
        %v534 = vld [vmem:[#allocation2 + $0x1a8] sm:$0xf]
        %v535 = vld [vmem:[#allocation2 + $0x1c8] sm:$0xf]
        %v536 = vld [vmem:[#allocation2 + $0x1e8] sm:$0xf]
        %v537 = vpack.c.bf16 %v506, %v505
        %v538 = vpack.c.bf16 %v508, %v507
        %v539 = vpack.c.bf16 %v510, %v509
        %v540 = vpack.c.bf16 %v512, %v511
        %v541 = vld [vmem:[#allocation2 + $0x4] sm:$0xf]
        %v542 = vld [vmem:[#allocation2 + $0x24] sm:$0xf]
        %v543 = vld [vmem:[#allocation2 + $0x44] sm:$0xf]
        %v544 = vld [vmem:[#allocation2 + $0x64] sm:$0xf]
        %v545 = vld [vmem:[#allocation2 + $0x84] sm:$0xf]
        %v546 = vld [vmem:[#allocation2 + $0xa4] sm:$0xf]
        %v547 = vld [vmem:[#allocation2 + $0xc4] sm:$0xf]
        %v548 = vld [vmem:[#allocation2 + $0xe4] sm:$0xf]
        %v549 = vld [vmem:[#allocation2 + $0x104] sm:$0xf]
        %v550 = vld [vmem:[#allocation2 + $0x124] sm:$0xf]
        %v551 = vld [vmem:[#allocation2 + $0x144] sm:$0xf]
        %v552 = vld [vmem:[#allocation2 + $0x164] sm:$0xf]
        %v553 = vld [vmem:[#allocation2 + $0x184] sm:$0xf]
        %v554 = vld [vmem:[#allocation2 + $0x1a4] sm:$0xf]
        %v555 = vld [vmem:[#allocation2 + $0x1c4] sm:$0xf]
        %v556 = vld [vmem:[#allocation2 + $0x1e4] sm:$0xf]
        %v557 = vpack.c.bf16 %v514, %v513
        %v558 = vpack.c.bf16 %v516, %v515
        %v559 = vpack.c.bf16 %v518, %v517
        %v560 = vpack.c.bf16 %v520, %v519
        %561 = vset.pattern.permute.xlu0 1
        %562 = vperm.xlu0 %561, %v240
        %v563 = vpop.permute.xlu0 %562
        %565 = vset.pattern.permute.xlu0 1
        %566 = vperm.xlu0 %565, %v241
        %v567 = vpop.permute.xlu0 %566
        %569 = vset.pattern.permute.xlu0 1
        %570 = vperm.xlu0 %569, %v242
        %v571 = vpop.permute.xlu0 %570
        %573 = vset.pattern.permute.xlu0 1
        %574 = vperm.xlu0 %573, %v243
        %v575 = vpop.permute.xlu0 %574
        %577 = vset.pattern.permute.xlu0 1
        %578 = vperm.xlu0 %577, %v244
        %v579 = vpop.permute.xlu0 %578
        %581 = vset.pattern.permute.xlu0 1
        %582 = vperm.xlu0 %581, %v245
        %v583 = vpop.permute.xlu0 %582
        %585 = vset.pattern.permute.xlu0 1
        %586 = vperm.xlu0 %585, %v246
        %v587 = vpop.permute.xlu0 %586
        %589 = vset.pattern.permute.xlu0 1
        %590 = vperm.xlu0 %589, %v247
        %v591 = vpop.permute.xlu0 %590
        %593 = vset.pattern.permute.xlu0 1
        %594 = vperm.xlu0 %593, %v248
        %v595 = vpop.permute.xlu0 %594
        %597 = vset.pattern.permute.xlu0 1
        %598 = vperm.xlu0 %597, %v249
        %v599 = vpop.permute.xlu0 %598
        %601 = vset.pattern.permute.xlu0 1
        %602 = vperm.xlu0 %601, %v250
        %v603 = vpop.permute.xlu0 %602
        %605 = vset.pattern.permute.xlu0 1
        %606 = vperm.xlu0 %605, %v251
        %v607 = vpop.permute.xlu0 %606
        %609 = vset.pattern.permute.xlu0 1
        %610 = vperm.xlu0 %609, %v252
        %v611 = vpop.permute.xlu0 %610
        %613 = vset.pattern.permute.xlu0 1
        %614 = vperm.xlu0 %613, %v253
        %v615 = vpop.permute.xlu0 %614
        %617 = vset.pattern.permute.xlu0 1
        %618 = vperm.xlu0 %617, %v254
        %v619 = vpop.permute.xlu0 %618
        %621 = vset.pattern.permute.xlu0 1
        %622 = vperm.xlu0 %621, %v255
        %v623 = vpop.permute.xlu0 %622
        %v641 = vunpack.c.l.b16 %v541
        %v642 = vunpack.c.l.b16 %v542
        %v643 = vunpack.c.l.b16 %v543
        %v644 = vunpack.c.l.b16 %v544
        %v645 = vunpack.c.l.b16 %v545
        %v646 = vunpack.c.l.b16 %v546
        %v647 = vunpack.c.l.b16 %v547
        %v648 = vunpack.c.l.b16 %v548
        %v649 = vunpack.c.l.b16 %v549
        %v650 = vunpack.c.l.b16 %v550
        %v651 = vunpack.c.l.b16 %v551
        %v652 = vunpack.c.l.b16 %v552
        %v653 = vunpack.c.l.b16 %v553
        %v654 = vunpack.c.l.b16 %v554
        %v655 = vunpack.c.l.b16 %v555
        %v656 = vunpack.c.l.b16 %v556
        %v657 = vpack.c.b16 %v642, %v641
        %v658 = vpack.c.b16 %v644, %v643
        %v659 = vpack.c.b16 %v646, %v645
        %v660 = vpack.c.b16 %v648, %v647
        %v661 = vpack.c.b16 %v650, %v649
        %v662 = vpack.c.b16 %v652, %v651
        %v663 = vpack.c.b16 %v654, %v653
        %v664 = vpack.c.b16 %v656, %v655
        %vm665 = vcmask 523264
        %v667 = vsel %vm665, %v657, 0
        %v670 = vsel %vm665, %v658, 0
        %v673 = vsel %vm665, %v659, 0
        %v676 = vsel %vm665, %v660, 0
        %v679 = vsel %vm665, %v661, 0
        %v682 = vsel %vm665, %v662, 0
        %v685 = vsel %vm665, %v663, 0
        %v688 = vsel %vm665, %v664, 0
        %690 = vmatprep.subr.bf16.mxu0 0
        %691 = vmatpush1.bf16.msra.mxu0 %v557
        %692 = vmatprep.subr.bf16.mxu0 0
        %693 = vmatpush1.bf16.msra.mxu0 %v558
        %694 = vmatprep.subr.bf16.mxu0 0
        %695 = vmatpush1.bf16.msra.mxu0 %v559
        %696 = vmatprep.subr.bf16.mxu0 0
        %697 = vmatpush1.bf16.msra.mxu0 %v560
        %698 = vmatprep.subr.bf16.mxu0 0
        %699 = vmatpush1.bf16.msra.mxu0 0
        %700 = vmatprep.subr.bf16.mxu0 0
        %701 = vmatpush1.bf16.msra.mxu0 0
        %702 = vmatprep.subr.bf16.mxu0 0
        %703 = vmatpush1.bf16.msra.mxu0 0
        %704 = vmatprep.subr.bf16.mxu0 0
        %705 = vmatpush1.bf16.msra.mxu0 0
        %706 = vmatprep.subr.bf16.mxu0 0
        %707 = vmatpush1.bf16.msra.mxu0 0
        %708 = vmatprep.subr.bf16.mxu0 0
        %709 = vmatpush1.bf16.msra.mxu0 0
        %710 = vmatprep.subr.bf16.mxu0 0
        %711 = vmatpush1.bf16.msra.mxu0 0
        %712 = vmatprep.subr.bf16.mxu0 0
        %713 = vmatpush1.bf16.msra.mxu0 0
        %714 = vmatprep.subr.bf16.mxu0 0
        %715 = vmatpush1.bf16.msra.mxu0 0
        %716 = vmatprep.subr.bf16.mxu0 0
        %717 = vmatpush1.bf16.msra.mxu0 0
        %718 = vmatprep.subr.bf16.mxu0 0
        %719 = vmatpush1.bf16.msra.mxu0 0
        %720 = vmatprep.subr.bf16.mxu0 0
        %721 = vmatpush1.bf16.msra.mxu0 0
        %722 = vmatprep.mubr.bf16.mxu0 0
        %723 = vmatmul.mubr.bf16.gmra.mrb[0].mxu0 %v667
        %v724 = vpop.f32.mrb[0].mxu0
        %v725 = vadd.f32 %v563, %v724
        %v726 = vpop.f32.mrb[0].mxu0
        %v727 = vpop.f32.mrb[0].mxu0
        %v728 = vadd.f32 %v567, %v727
        %v729 = vpop.f32.mrb[0].mxu0
        %730 = vmatprep.mubr.bf16.mxu0 0
        %731 = vmatmul.mubr.bf16.gmra.mrb[0].mxu0 %v670
        %v732 = vpop.f32.mrb[0].mxu0
        %v733 = vadd.f32 %v571, %v732
        %v734 = vpop.f32.mrb[0].mxu0
        %v735 = vpop.f32.mrb[0].mxu0
        %v736 = vadd.f32 %v575, %v735
        %v737 = vpop.f32.mrb[0].mxu0
        %738 = vmatprep.mubr.bf16.mxu0 0
        %739 = vmatmul.mubr.bf16.gmra.mrb[0].mxu0 %v673
        %v740 = vpop.f32.mrb[0].mxu0
        %v741 = vadd.f32 %v579, %v740
        %v742 = vpop.f32.mrb[0].mxu0
        %v743 = vpop.f32.mrb[0].mxu0
        %v744 = vadd.f32 %v583, %v743
        %v745 = vpop.f32.mrb[0].mxu0
        %746 = vmatprep.mubr.bf16.mxu0 0
        %747 = vmatmul.mubr.bf16.gmra.mrb[0].mxu0 %v676
        %v748 = vpop.f32.mrb[0].mxu0
        %v749 = vadd.f32 %v587, %v748
        %v750 = vpop.f32.mrb[0].mxu0
        %v751 = vpop.f32.mrb[0].mxu0
        %v752 = vadd.f32 %v591, %v751
        %v753 = vpop.f32.mrb[0].mxu0
        %754 = vmatprep.mubr.bf16.mxu0 0
        %755 = vmatmul.mubr.bf16.gmra.mrb[0].mxu0 %v679
        %v756 = vpop.f32.mrb[0].mxu0
        %v757 = vadd.f32 %v595, %v756
        %v758 = vpop.f32.mrb[0].mxu0
        %v759 = vpop.f32.mrb[0].mxu0
        %v760 = vadd.f32 %v599, %v759
        %v761 = vpop.f32.mrb[0].mxu0
        %762 = vmatprep.mubr.bf16.mxu0 0
        %763 = vmatmul.mubr.bf16.gmra.mrb[0].mxu0 %v682
        %v764 = vpop.f32.mrb[0].mxu0
        %v765 = vadd.f32 %v603, %v764
        %v766 = vpop.f32.mrb[0].mxu0
        %v767 = vpop.f32.mrb[0].mxu0
        %v768 = vadd.f32 %v607, %v767
        %v769 = vpop.f32.mrb[0].mxu0
        %770 = vmatprep.mubr.bf16.mxu0 0
        %771 = vmatmul.mubr.bf16.gmra.mrb[0].mxu0 %v685
        %v772 = vpop.f32.mrb[0].mxu0
        %v773 = vadd.f32 %v611, %v772
        %v774 = vpop.f32.mrb[0].mxu0
        %v775 = vpop.f32.mrb[0].mxu0
        %v776 = vadd.f32 %v615, %v775
        %v777 = vpop.f32.mrb[0].mxu0
        %778 = vmatprep.mubr.bf16.mxu0 0
        %779 = vmatmul.mubr.bf16.gmra.mrb[0].mxu0 %v688
        %v780 = vpop.f32.mrb[0].mxu0
        %v781 = vadd.f32 %v619, %v780
        %v782 = vpop.f32.mrb[0].mxu0
        %v783 = vpop.f32.mrb[0].mxu0
        %v784 = vadd.f32 %v623, %v783
        %v785 = vpop.f32.mrb[0].mxu0
        %786 = vdwg.mxu0
        %v787 = vmax.f32 %v725, 0.0
        %v788 = vmax.f32 %v728, 0.0
        %v789 = vmax.f32 %v733, 0.0
        %v790 = vmax.f32 %v736, 0.0
        %v791 = vmax.f32 %v741, 0.0
        %v792 = vmax.f32 %v744, 0.0
        %v793 = vmax.f32 %v749, 0.0
        %v794 = vmax.f32 %v752, 0.0
        %v795 = vmax.f32 %v757, 0.0
        %v796 = vmax.f32 %v760, 0.0
        %v797 = vmax.f32 %v765, 0.0
        %v798 = vmax.f32 %v768, 0.0
        %v799 = vmax.f32 %v773, 0.0
        %v800 = vmax.f32 %v776, 0.0
        %v801 = vmax.f32 %v781, 0.0
        %v802 = vmax.f32 %v784, 0.0
        %v803 = vld [vmem:[#allocation2 + $0x14] sm:$0xf]
        %v804 = vld [vmem:[#allocation2 + $0x34] sm:$0xf]
        %v805 = vld [vmem:[#allocation2 + $0x54] sm:$0xf]
        %v806 = vld [vmem:[#allocation2 + $0x74] sm:$0xf]
        %v807 = vld [vmem:[#allocation2 + $0x94] sm:$0xf]
        %v808 = vld [vmem:[#allocation2 + $0xb4] sm:$0xf]
        %v809 = vld [vmem:[#allocation2 + $0xd4] sm:$0xf]
        %v810 = vld [vmem:[#allocation2 + $0xf4] sm:$0xf]
        %v811 = vld [vmem:[#allocation2 + $0x114] sm:$0xf]
        %v812 = vld [vmem:[#allocation2 + $0x134] sm:$0xf]
        %v813 = vld [vmem:[#allocation2 + $0x154] sm:$0xf]
        %v814 = vld [vmem:[#allocation2 + $0x174] sm:$0xf]
        %v815 = vld [vmem:[#allocation2 + $0x194] sm:$0xf]
        %v816 = vld [vmem:[#allocation2 + $0x1b4] sm:$0xf]
        %v817 = vld [vmem:[#allocation2 + $0x1d4] sm:$0xf]
        %v818 = vld [vmem:[#allocation2 + $0x1f4] sm:$0xf]
        %v819 = vld [vmem:[#allocation2 + $0x214] sm:$0xf]
        %v820 = vld [vmem:[#allocation2 + $0x234] sm:$0xf]
        %v821 = vld [vmem:[#allocation2 + $0x254] sm:$0xf]
        %v822 = vld [vmem:[#allocation2 + $0x274] sm:$0xf]
        %v823 = vld [vmem:[#allocation2 + $0x294] sm:$0xf]
        %v824 = vld [vmem:[#allocation2 + $0x2b4] sm:$0xf]
        %v825 = vld [vmem:[#allocation2 + $0x2d4] sm:$0xf]
        %v826 = vld [vmem:[#allocation2 + $0x2f4] sm:$0xf]
        %v827 = vld [vmem:[#allocation2 + $0x314] sm:$0xf]
        %v828 = vld [vmem:[#allocation2 + $0x334] sm:$0xf]
        %v829 = vld [vmem:[#allocation2 + $0x354] sm:$0xf]
        %v830 = vld [vmem:[#allocation2 + $0x374] sm:$0xf]
        %v831 = vld [vmem:[#allocation2 + $0x394] sm:$0xf]
        %v832 = vld [vmem:[#allocation2 + $0x3b4] sm:$0xf]
        %v833 = vld [vmem:[#allocation2 + $0x3d4] sm:$0xf]
        %v834 = vld [vmem:[#allocation2 + $0x3f4] sm:$0xf]
        %v835 = vpack.c.bf16 %v788, %v787
        %v836 = vpack.c.bf16 %v790, %v789
        %v837 = vpack.c.bf16 %v792, %v791
        %v838 = vpack.c.bf16 %v794, %v793
        %v839 = vpack.c.bf16 %v796, %v795
        %v840 = vpack.c.bf16 %v798, %v797
        %v841 = vpack.c.bf16 %v800, %v799
        %v842 = vpack.c.bf16 %v802, %v801
        %v843 = vld [vmem:[%s3] sm:$0xff]
        %v844 = vld [vmem:[%s3 + $0x8] sm:$0xff]
        %v845 = vld [vmem:[%s3 + $0x10] sm:$0xff]
        %v846 = vld [vmem:[%s3 + $0x18] sm:$0xff]
        %v847 = vld [vmem:[%s3 + $0x20] sm:$0xff]
        %v848 = vld [vmem:[%s3 + $0x28] sm:$0xff]
        %v849 = vld [vmem:[%s3 + $0x30] sm:$0xff]
        %v850 = vld [vmem:[%s3 + $0x38] sm:$0xff]
        %v851 = vld [vmem:[%s3 + $0x40] sm:$0xff]
        %v852 = vld [vmem:[%s3 + $0x48] sm:$0xff]
        %v853 = vld [vmem:[%s3 + $0x50] sm:$0xff]
        %v854 = vld [vmem:[%s3 + $0x58] sm:$0xff]
        %v855 = vld [vmem:[%s3 + $0x60] sm:$0xff]
        %v856 = vld [vmem:[%s3 + $0x68] sm:$0xff]
        %v857 = vld [vmem:[%s3 + $0x70] sm:$0xff]
        %v858 = vld [vmem:[%s3 + $0x78] sm:$0xff]
        %v859 = vld [vmem:[%s3 + $0x80] sm:$0xff]
        %v860 = vld [vmem:[%s3 + $0x88] sm:$0xff]
        %v861 = vld [vmem:[%s3 + $0x90] sm:$0xff]
        %v862 = vld [vmem:[%s3 + $0x98] sm:$0xff]
        %v863 = vld [vmem:[%s3 + $0xa0] sm:$0xff]
        %v864 = vld [vmem:[%s3 + $0xa8] sm:$0xff]
        %v865 = vld [vmem:[%s3 + $0xb0] sm:$0xff]
        %v866 = vld [vmem:[%s3 + $0xb8] sm:$0xff]
        %v867 = vld [vmem:[%s3 + $0xc0] sm:$0xff]
        %v868 = vld [vmem:[%s3 + $0xc8] sm:$0xff]
        %v869 = vld [vmem:[%s3 + $0xd0] sm:$0xff]
        %v870 = vld [vmem:[%s3 + $0xd8] sm:$0xff]
        %v871 = vld [vmem:[%s3 + $0xe0] sm:$0xff]
        %v872 = vld [vmem:[%s3 + $0xe8] sm:$0xff]
        %v873 = vld [vmem:[%s3 + $0xf0] sm:$0xff]
        %v874 = vld [vmem:[%s3 + $0xf8] sm:$0xff]
        %876 = vset.pattern.permute.xlu0 2
        %877 = vperm.xlu0 %876, %v843
        %v878 = vpop.permute.xlu0 %877
        %881 = vset.pattern.permute.xlu0 2
        %882 = vperm.xlu0 %881, %v844
        %v883 = vpop.permute.xlu0 %882
        %886 = vset.pattern.permute.xlu0 2
        %887 = vperm.xlu0 %886, %v845
        %v888 = vpop.permute.xlu0 %887
        %891 = vset.pattern.permute.xlu0 2
        %892 = vperm.xlu0 %891, %v846
        %v893 = vpop.permute.xlu0 %892
        %896 = vset.pattern.permute.xlu0 2
        %897 = vperm.xlu0 %896, %v847
        %v898 = vpop.permute.xlu0 %897
        %901 = vset.pattern.permute.xlu0 2
        %902 = vperm.xlu0 %901, %v848
        %v903 = vpop.permute.xlu0 %902
        %906 = vset.pattern.permute.xlu0 2
        %907 = vperm.xlu0 %906, %v849
        %v908 = vpop.permute.xlu0 %907
        %911 = vset.pattern.permute.xlu0 2
        %912 = vperm.xlu0 %911, %v850
        %v913 = vpop.permute.xlu0 %912
        %916 = vset.pattern.permute.xlu0 2
        %917 = vperm.xlu0 %916, %v851
        %v918 = vpop.permute.xlu0 %917
        %921 = vset.pattern.permute.xlu0 2
        %922 = vperm.xlu0 %921, %v852
        %v923 = vpop.permute.xlu0 %922
        %926 = vset.pattern.permute.xlu0 2
        %927 = vperm.xlu0 %926, %v853
        %v928 = vpop.permute.xlu0 %927
        %931 = vset.pattern.permute.xlu0 2
        %932 = vperm.xlu0 %931, %v854
        %v933 = vpop.permute.xlu0 %932
        %936 = vset.pattern.permute.xlu0 2
        %937 = vperm.xlu0 %936, %v855
        %v938 = vpop.permute.xlu0 %937
        %941 = vset.pattern.permute.xlu0 2
        %942 = vperm.xlu0 %941, %v856
        %v943 = vpop.permute.xlu0 %942
        %946 = vset.pattern.permute.xlu0 2
        %947 = vperm.xlu0 %946, %v857
        %v948 = vpop.permute.xlu0 %947
        %951 = vset.pattern.permute.xlu0 2
        %952 = vperm.xlu0 %951, %v858
        %v953 = vpop.permute.xlu0 %952
        %956 = vset.pattern.permute.xlu0 2
        %957 = vperm.xlu0 %956, %v859
        %v958 = vpop.permute.xlu0 %957
        %961 = vset.pattern.permute.xlu0 2
        %962 = vperm.xlu0 %961, %v860
        %v963 = vpop.permute.xlu0 %962
        %966 = vset.pattern.permute.xlu0 2
        %967 = vperm.xlu0 %966, %v861
        %v968 = vpop.permute.xlu0 %967
        %971 = vset.pattern.permute.xlu0 2
        %972 = vperm.xlu0 %971, %v862
        %v973 = vpop.permute.xlu0 %972
        %976 = vset.pattern.permute.xlu0 2
        %977 = vperm.xlu0 %976, %v863
        %v978 = vpop.permute.xlu0 %977
        %981 = vset.pattern.permute.xlu0 2
        %982 = vperm.xlu0 %981, %v864
        %v983 = vpop.permute.xlu0 %982
        %986 = vset.pattern.permute.xlu0 2
        %987 = vperm.xlu0 %986, %v865
        %v988 = vpop.permute.xlu0 %987
        %991 = vset.pattern.permute.xlu0 2
        %992 = vperm.xlu0 %991, %v866
        %v993 = vpop.permute.xlu0 %992
        %996 = vset.pattern.permute.xlu0 2
        %997 = vperm.xlu0 %996, %v867
        %v998 = vpop.permute.xlu0 %997
        %1001 = vset.pattern.permute.xlu0 2
        %1002 = vperm.xlu0 %1001, %v868
        %v1003 = vpop.permute.xlu0 %1002
        %1006 = vset.pattern.permute.xlu0 2
        %1007 = vperm.xlu0 %1006, %v869
        %v1008 = vpop.permute.xlu0 %1007
        %1011 = vset.pattern.permute.xlu0 2
        %1012 = vperm.xlu0 %1011, %v870
        %v1013 = vpop.permute.xlu0 %1012
        %1016 = vset.pattern.permute.xlu0 2
        %1017 = vperm.xlu0 %1016, %v871
        %v1018 = vpop.permute.xlu0 %1017
        %1021 = vset.pattern.permute.xlu0 2
        %1022 = vperm.xlu0 %1021, %v872
        %v1023 = vpop.permute.xlu0 %1022
        %1026 = vset.pattern.permute.xlu0 2
        %1027 = vperm.xlu0 %1026, %v873
        %v1028 = vpop.permute.xlu0 %1027
        %1031 = vset.pattern.permute.xlu0 2
        %1032 = vperm.xlu0 %1031, %v874
        %v1033 = vpop.permute.xlu0 %1032
        %v1067 = vunpack.c.l.b16 %v803
        %v1068 = vunpack.c.l.b16 %v804
        %v1069 = vunpack.c.l.b16 %v805
        %v1070 = vunpack.c.l.b16 %v806
        %v1071 = vunpack.c.l.b16 %v807
        %v1072 = vunpack.c.l.b16 %v808
        %v1073 = vunpack.c.l.b16 %v809
        %v1074 = vunpack.c.l.b16 %v810
        %v1075 = vunpack.c.l.b16 %v811
        %v1076 = vunpack.c.l.b16 %v812
        %v1077 = vunpack.c.l.b16 %v813
        %v1078 = vunpack.c.l.b16 %v814
        %v1079 = vunpack.c.l.b16 %v815
        %v1080 = vunpack.c.l.b16 %v816
        %v1081 = vunpack.c.l.b16 %v817
        %v1082 = vunpack.c.l.b16 %v818
        %v1083 = vunpack.c.l.b16 %v819
        %v1084 = vunpack.c.l.b16 %v820
        %v1085 = vunpack.c.l.b16 %v821
        %v1086 = vunpack.c.l.b16 %v822
        %v1087 = vunpack.c.l.b16 %v823
        %v1088 = vunpack.c.l.b16 %v824
        %v1089 = vunpack.c.l.b16 %v825
        %v1090 = vunpack.c.l.b16 %v826
        %v1091 = vunpack.c.l.b16 %v827
        %v1092 = vunpack.c.l.b16 %v828
        %v1093 = vunpack.c.l.b16 %v829
        %v1094 = vunpack.c.l.b16 %v830
        %v1095 = vunpack.c.l.b16 %v831
        %v1096 = vunpack.c.l.b16 %v832
        %v1097 = vunpack.c.l.b16 %v833
        %v1098 = vunpack.c.l.b16 %v834
        %v1099 = vpack.c.b16 %v1068, %v1067
        %v1100 = vpack.c.b16 %v1070, %v1069
        %v1101 = vpack.c.b16 %v1072, %v1071
        %v1102 = vpack.c.b16 %v1074, %v1073
        %v1103 = vpack.c.b16 %v1076, %v1075
        %v1104 = vpack.c.b16 %v1078, %v1077
        %v1105 = vpack.c.b16 %v1080, %v1079
        %v1106 = vpack.c.b16 %v1082, %v1081
        %v1107 = vpack.c.b16 %v1084, %v1083
        %v1108 = vpack.c.b16 %v1086, %v1085
        %v1109 = vpack.c.b16 %v1088, %v1087
        %v1110 = vpack.c.b16 %v1090, %v1089
        %v1111 = vpack.c.b16 %v1092, %v1091
        %v1112 = vpack.c.b16 %v1094, %v1093
        %v1113 = vpack.c.b16 %v1096, %v1095
        %v1114 = vpack.c.b16 %v1098, %v1097
        %1131 = vmatprep.subr.bf16.mxu0 0
        %1132 = vmatpush1.bf16.msra.mxu0 %v835
        %1133 = vmatprep.subr.bf16.mxu0 0
        %1134 = vmatpush1.bf16.msra.mxu0 %v836
        %1135 = vmatprep.subr.bf16.mxu0 0
        %1136 = vmatpush1.bf16.msra.mxu0 %v837
        %1137 = vmatprep.subr.bf16.mxu0 0
        %1138 = vmatpush1.bf16.msra.mxu0 %v838
        %1139 = vmatprep.subr.bf16.mxu0 0
        %1140 = vmatpush1.bf16.msra.mxu0 %v839
        %1141 = vmatprep.subr.bf16.mxu0 0
        %1142 = vmatpush1.bf16.msra.mxu0 %v840
        %1143 = vmatprep.subr.bf16.mxu0 0
        %1144 = vmatpush1.bf16.msra.mxu0 %v841
        %1145 = vmatprep.subr.bf16.mxu0 0
        %1146 = vmatpush1.bf16.msra.mxu0 %v842
        %1147 = vmatprep.subr.bf16.mxu0 0
        %1148 = vmatpush1.bf16.msra.mxu0 0
        %1149 = vmatprep.subr.bf16.mxu0 0
        %1150 = vmatpush1.bf16.msra.mxu0 0
        %1151 = vmatprep.subr.bf16.mxu0 0
        %1152 = vmatpush1.bf16.msra.mxu0 0
        %1153 = vmatprep.subr.bf16.mxu0 0
        %1154 = vmatpush1.bf16.msra.mxu0 0
        %1155 = vmatprep.subr.bf16.mxu0 0
        %1156 = vmatpush1.bf16.msra.mxu0 0
        %1157 = vmatprep.subr.bf16.mxu0 0
        %1158 = vmatpush1.bf16.msra.mxu0 0
        %1159 = vmatprep.subr.bf16.mxu0 0
        %1160 = vmatpush1.bf16.msra.mxu0 0
        %1161 = vmatprep.subr.bf16.mxu0 0
        %1162 = vmatpush1.bf16.msra.mxu0 0
        %1163 = vmatprep.mubr.bf16.mxu0 0
        %1164 = vmatmul.mubr.bf16.gmra.mrb[0].mxu0 %v1099
        %v1165 = vpop.f32.mrb[0].mxu0
        %v1166 = vadd.f32 %v878, %v1165
        %v1167 = vpop.f32.mrb[0].mxu0
        %v1168 = vpop.f32.mrb[0].mxu0
        %v1169 = vadd.f32 %v883, %v1168
        %v1170 = vpop.f32.mrb[0].mxu0
        %1171 = vmatprep.mubr.bf16.mxu0 0
        %1172 = vmatmul.mubr.bf16.gmra.mrb[0].mxu0 %v1100
        %v1173 = vpop.f32.mrb[0].mxu0
        %v1174 = vadd.f32 %v888, %v1173
        %v1175 = vpop.f32.mrb[0].mxu0
        %v1176 = vpop.f32.mrb[0].mxu0
        %v1177 = vadd.f32 %v893, %v1176
        %v1178 = vpop.f32.mrb[0].mxu0
        %1179 = vmatprep.mubr.bf16.mxu0 0
        %1180 = vmatmul.mubr.bf16.gmra.mrb[0].mxu0 %v1101
        %v1181 = vpop.f32.mrb[0].mxu0
        %v1182 = vadd.f32 %v898, %v1181
        %v1183 = vpop.f32.mrb[0].mxu0
        %v1184 = vpop.f32.mrb[0].mxu0
        %v1185 = vadd.f32 %v903, %v1184
        %v1186 = vpop.f32.mrb[0].mxu0
        %1187 = vmatprep.mubr.bf16.mxu0 0
        %1188 = vmatmul.mubr.bf16.gmra.mrb[0].mxu0 %v1102
        %v1189 = vpop.f32.mrb[0].mxu0
        %v1190 = vadd.f32 %v908, %v1189
        %v1191 = vpop.f32.mrb[0].mxu0
        %v1192 = vpop.f32.mrb[0].mxu0
        %v1193 = vadd.f32 %v913, %v1192
        %v1194 = vpop.f32.mrb[0].mxu0
        %1195 = vmatprep.mubr.bf16.mxu0 0
        %1196 = vmatmul.mubr.bf16.gmra.mrb[0].mxu0 %v1103
        %v1197 = vpop.f32.mrb[0].mxu0
        %v1198 = vadd.f32 %v918, %v1197
        %v1199 = vpop.f32.mrb[0].mxu0
        %v1200 = vpop.f32.mrb[0].mxu0
        %v1201 = vadd.f32 %v923, %v1200
        %v1202 = vpop.f32.mrb[0].mxu0
        %1203 = vmatprep.mubr.bf16.mxu0 0
        %1204 = vmatmul.mubr.bf16.gmra.mrb[0].mxu0 %v1104
        %v1205 = vpop.f32.mrb[0].mxu0
        %v1206 = vadd.f32 %v928, %v1205
        %v1207 = vpop.f32.mrb[0].mxu0
        %v1208 = vpop.f32.mrb[0].mxu0
        %v1209 = vadd.f32 %v933, %v1208
        %v1210 = vpop.f32.mrb[0].mxu0
        %1211 = vmatprep.mubr.bf16.mxu0 0
        %1212 = vmatmul.mubr.bf16.gmra.mrb[0].mxu0 %v1105
        %v1213 = vpop.f32.mrb[0].mxu0
        %v1214 = vadd.f32 %v938, %v1213
        %v1215 = vpop.f32.mrb[0].mxu0
        %v1216 = vpop.f32.mrb[0].mxu0
        %v1217 = vadd.f32 %v943, %v1216
        %v1218 = vpop.f32.mrb[0].mxu0
        %1219 = vmatprep.mubr.bf16.mxu0 0
        %1220 = vmatmul.mubr.bf16.gmra.mrb[0].mxu0 %v1106
        %v1221 = vpop.f32.mrb[0].mxu0
        %v1222 = vadd.f32 %v948, %v1221
        %v1223 = vpop.f32.mrb[0].mxu0
        %v1224 = vpop.f32.mrb[0].mxu0
        %v1225 = vadd.f32 %v953, %v1224
        %v1226 = vpop.f32.mrb[0].mxu0
        %1227 = vmatprep.mubr.bf16.mxu0 0
        %1228 = vmatmul.mubr.bf16.gmra.mrb[0].mxu0 %v1107
        %v1229 = vpop.f32.mrb[0].mxu0
        %v1230 = vadd.f32 %v958, %v1229
        %v1231 = vpop.f32.mrb[0].mxu0
        %v1232 = vpop.f32.mrb[0].mxu0
        %v1233 = vadd.f32 %v963, %v1232
        %v1234 = vpop.f32.mrb[0].mxu0
        %1235 = vmatprep.mubr.bf16.mxu0 0
        %1236 = vmatmul.mubr.bf16.gmra.mrb[0].mxu0 %v1108
        %v1237 = vpop.f32.mrb[0].mxu0
        %v1238 = vadd.f32 %v968, %v1237
        %v1239 = vpop.f32.mrb[0].mxu0
        %v1240 = vpop.f32.mrb[0].mxu0
        %v1241 = vadd.f32 %v973, %v1240
        %v1242 = vpop.f32.mrb[0].mxu0
        %1243 = vmatprep.mubr.bf16.mxu0 0
        %1244 = vmatmul.mubr.bf16.gmra.mrb[0].mxu0 %v1109
        %v1245 = vpop.f32.mrb[0].mxu0
        %v1246 = vadd.f32 %v978, %v1245
        %v1247 = vpop.f32.mrb[0].mxu0
        %v1248 = vpop.f32.mrb[0].mxu0
        %v1249 = vadd.f32 %v983, %v1248
        %v1250 = vpop.f32.mrb[0].mxu0
        %1251 = vmatprep.mubr.bf16.mxu0 0
        %1252 = vmatmul.mubr.bf16.gmra.mrb[0].mxu0 %v1110
        %v1253 = vpop.f32.mrb[0].mxu0
        %v1254 = vadd.f32 %v988, %v1253
        %v1255 = vpop.f32.mrb[0].mxu0
        %v1256 = vpop.f32.mrb[0].mxu0
        %v1257 = vadd.f32 %v993, %v1256
        %v1258 = vpop.f32.mrb[0].mxu0
        %1259 = vmatprep.mubr.bf16.mxu0 0
        %1260 = vmatmul.mubr.bf16.gmra.mrb[0].mxu0 %v1111
        %v1261 = vpop.f32.mrb[0].mxu0
        %v1262 = vadd.f32 %v998, %v1261
        %v1263 = vpop.f32.mrb[0].mxu0
        %v1264 = vpop.f32.mrb[0].mxu0
        %v1265 = vadd.f32 %v1003, %v1264
        %v1266 = vpop.f32.mrb[0].mxu0
        %1267 = vmatprep.mubr.bf16.mxu0 0
        %1268 = vmatmul.mubr.bf16.gmra.mrb[0].mxu0 %v1112
        %v1269 = vpop.f32.mrb[0].mxu0
        %v1270 = vadd.f32 %v1008, %v1269
        %v1271 = vpop.f32.mrb[0].mxu0
        %v1272 = vpop.f32.mrb[0].mxu0
        %v1273 = vadd.f32 %v1013, %v1272
        %v1274 = vpop.f32.mrb[0].mxu0
        %1275 = vmatprep.mubr.bf16.mxu0 0
        %1276 = vmatmul.mubr.bf16.gmra.mrb[0].mxu0 %v1113
        %v1277 = vpop.f32.mrb[0].mxu0
        %v1278 = vadd.f32 %v1018, %v1277
        %v1279 = vpop.f32.mrb[0].mxu0
        %v1280 = vpop.f32.mrb[0].mxu0
        %v1281 = vadd.f32 %v1023, %v1280
        %v1282 = vpop.f32.mrb[0].mxu0
        %1283 = vmatprep.mubr.bf16.mxu0 0
        %1284 = vmatmul.mubr.bf16.gmra.mrb[0].mxu0 %v1114
        %v1285 = vpop.f32.mrb[0].mxu0
        %v1286 = vadd.f32 %v1028, %v1285
        %v1287 = vpop.f32.mrb[0].mxu0
        %v1288 = vpop.f32.mrb[0].mxu0
        %v1289 = vadd.f32 %v1033, %v1288
        %v1290 = vpop.f32.mrb[0].mxu0
        %1291 = vdwg.mxu0
        %v1292 = vmax.f32 %v1166, 0.0
        %v1293 = vmax.f32 %v1169, 0.0
        %v1294 = vmax.f32 %v1174, 0.0
        %v1295 = vmax.f32 %v1177, 0.0
        %v1296 = vmax.f32 %v1182, 0.0
        %v1297 = vmax.f32 %v1185, 0.0
        %v1298 = vmax.f32 %v1190, 0.0
        %v1299 = vmax.f32 %v1193, 0.0
        %v1300 = vmax.f32 %v1198, 0.0
        %v1301 = vmax.f32 %v1201, 0.0
        %v1302 = vmax.f32 %v1206, 0.0
        %v1303 = vmax.f32 %v1209, 0.0
        %v1304 = vmax.f32 %v1214, 0.0
        %v1305 = vmax.f32 %v1217, 0.0
        %v1306 = vmax.f32 %v1222, 0.0
        %v1307 = vmax.f32 %v1225, 0.0
        %v1308 = vmax.f32 %v1230, 0.0
        %v1309 = vmax.f32 %v1233, 0.0
        %v1310 = vmax.f32 %v1238, 0.0
        %v1311 = vmax.f32 %v1241, 0.0
        %v1312 = vmax.f32 %v1246, 0.0
        %v1313 = vmax.f32 %v1249, 0.0
        %v1314 = vmax.f32 %v1254, 0.0
        %v1315 = vmax.f32 %v1257, 0.0
        %v1316 = vmax.f32 %v1262, 0.0
        %v1317 = vmax.f32 %v1265, 0.0
        %v1318 = vmax.f32 %v1270, 0.0
        %v1319 = vmax.f32 %v1273, 0.0
        %v1320 = vmax.f32 %v1278, 0.0
        %v1321 = vmax.f32 %v1281, 0.0
        %v1322 = vmax.f32 %v1286, 0.0
        %v1323 = vmax.f32 %v1289, 0.0
        %v1324 = vld [vmem:[#allocation2 + $0x18] sm:$0xff]
        %v1325 = vld [vmem:[#allocation2 + $0x38] sm:$0xff]
        %v1326 = vld [vmem:[#allocation2 + $0x58] sm:$0xff]
        %v1327 = vld [vmem:[#allocation2 + $0x78] sm:$0xff]
        %v1328 = vld [vmem:[#allocation2 + $0x98] sm:$0xff]
        %v1329 = vld [vmem:[#allocation2 + $0xb8] sm:$0xff]
        %v1330 = vld [vmem:[#allocation2 + $0xd8] sm:$0xff]
        %v1331 = vld [vmem:[#allocation2 + $0xf8] sm:$0xff]
        %v1332 = vld [vmem:[#allocation2 + $0x118] sm:$0xff]
        %v1333 = vld [vmem:[#allocation2 + $0x138] sm:$0xff]
        %v1334 = vld [vmem:[#allocation2 + $0x158] sm:$0xff]
        %v1335 = vld [vmem:[#allocation2 + $0x178] sm:$0xff]
        %v1336 = vld [vmem:[#allocation2 + $0x198] sm:$0xff]
        %v1337 = vld [vmem:[#allocation2 + $0x1b8] sm:$0xff]
        %v1338 = vld [vmem:[#allocation2 + $0x1d8] sm:$0xff]
        %v1339 = vld [vmem:[#allocation2 + $0x1f8] sm:$0xff]
        %v1340 = vpack.c.bf16 %v1293, %v1292
        %v1341 = vpack.c.bf16 %v1295, %v1294
        %v1342 = vpack.c.bf16 %v1297, %v1296
        %v1343 = vpack.c.bf16 %v1299, %v1298
        %v1344 = vpack.c.bf16 %v1301, %v1300
        %v1345 = vpack.c.bf16 %v1303, %v1302
        %v1346 = vpack.c.bf16 %v1305, %v1304
        %v1347 = vpack.c.bf16 %v1307, %v1306
        %v1348 = vpack.c.bf16 %v1309, %v1308
        %v1349 = vpack.c.bf16 %v1311, %v1310
        %v1350 = vpack.c.bf16 %v1313, %v1312
        %v1351 = vpack.c.bf16 %v1315, %v1314
        %v1352 = vpack.c.bf16 %v1317, %v1316
        %v1353 = vpack.c.bf16 %v1319, %v1318
        %v1354 = vpack.c.bf16 %v1321, %v1320
        %v1355 = vpack.c.bf16 %v1323, %v1322
        %v1372 = vunpack.c.l.b16 %v1324
        %v1373 = vunpack.c.h.b16 %v1324
        %v1374 = vunpack.c.l.b16 %v1325
        %v1375 = vunpack.c.h.b16 %v1325
        %v1376 = vunpack.c.l.b16 %v1326
        %v1377 = vunpack.c.h.b16 %v1326
        %v1378 = vunpack.c.l.b16 %v1327
        %v1379 = vunpack.c.h.b16 %v1327
        %v1380 = vunpack.c.l.b16 %v1328
        %v1381 = vunpack.c.h.b16 %v1328
        %v1382 = vunpack.c.l.b16 %v1329
        %v1383 = vunpack.c.h.b16 %v1329
        %v1384 = vunpack.c.l.b16 %v1330
        %v1385 = vunpack.c.h.b16 %v1330
        %v1386 = vunpack.c.l.b16 %v1331
        %v1387 = vunpack.c.h.b16 %v1331
        %v1388 = vunpack.c.l.b16 %v1332
        %v1389 = vunpack.c.h.b16 %v1332
        %v1390 = vunpack.c.l.b16 %v1333
        %v1391 = vunpack.c.h.b16 %v1333
        %v1392 = vunpack.c.l.b16 %v1334
        %v1393 = vunpack.c.h.b16 %v1334
        %v1394 = vunpack.c.l.b16 %v1335
        %v1395 = vunpack.c.h.b16 %v1335
        %v1396 = vunpack.c.l.b16 %v1336
        %v1397 = vunpack.c.h.b16 %v1336
        %v1398 = vunpack.c.l.b16 %v1337
        %v1399 = vunpack.c.h.b16 %v1337
        %v1400 = vunpack.c.l.b16 %v1338
        %v1401 = vunpack.c.h.b16 %v1338
        %v1402 = vunpack.c.l.b16 %v1339
        %v1403 = vunpack.c.h.b16 %v1339
        %v1404 = vpack.c.b16 %v1374, %v1372
        %v1405 = vpack.c.b16 %v1375, %v1373
        %v1406 = vpack.c.b16 %v1378, %v1376
        %v1407 = vpack.c.b16 %v1379, %v1377
        %v1408 = vpack.c.b16 %v1382, %v1380
        %v1409 = vpack.c.b16 %v1383, %v1381
        %v1410 = vpack.c.b16 %v1386, %v1384
        %v1411 = vpack.c.b16 %v1387, %v1385
        %v1412 = vpack.c.b16 %v1390, %v1388
        %v1413 = vpack.c.b16 %v1391, %v1389
        %v1414 = vpack.c.b16 %v1394, %v1392
        %v1415 = vpack.c.b16 %v1395, %v1393
        %v1416 = vpack.c.b16 %v1398, %v1396
        %v1417 = vpack.c.b16 %v1399, %v1397
        %v1418 = vpack.c.b16 %v1402, %v1400
        %v1419 = vpack.c.b16 %v1403, %v1401
        %1436 = vmatprep.subr.bf16.mxu0 0
        %1437 = vmatpush1.bf16.msra.mxu0 %v1340
        %1438 = vmatprep.subr.bf16.mxu0 0
        %1439 = vmatpush1.bf16.msra.mxu0 %v1341
        %1440 = vmatprep.subr.bf16.mxu0 0
        %1441 = vmatpush1.bf16.msra.mxu0 %v1342
        %1442 = vmatprep.subr.bf16.mxu0 0
        %1443 = vmatpush1.bf16.msra.mxu0 %v1343
        %1444 = vmatprep.subr.bf16.mxu0 0
        %1445 = vmatpush1.bf16.msra.mxu0 %v1344
        %1446 = vmatprep.subr.bf16.mxu0 0
        %1447 = vmatpush1.bf16.msra.mxu0 %v1345
        %1448 = vmatprep.subr.bf16.mxu0 0
        %1449 = vmatpush1.bf16.msra.mxu0 %v1346
        %1450 = vmatprep.subr.bf16.mxu0 0
        %1451 = vmatpush1.bf16.msra.mxu0 %v1347
        %1452 = vmatprep.subr.bf16.mxu0 0
        %1453 = vmatpush1.bf16.msra.mxu0 %v1348
        %1454 = vmatprep.subr.bf16.mxu0 0
        %1455 = vmatpush1.bf16.msra.mxu0 %v1349
        %1456 = vmatprep.subr.bf16.mxu0 0
        %1457 = vmatpush1.bf16.msra.mxu0 %v1350
        %1458 = vmatprep.subr.bf16.mxu0 0
        %1459 = vmatpush1.bf16.msra.mxu0 %v1351
        %1460 = vmatprep.subr.bf16.mxu0 0
        %1461 = vmatpush1.bf16.msra.mxu0 %v1352
        %1462 = vmatprep.subr.bf16.mxu0 0
        %1463 = vmatpush1.bf16.msra.mxu0 %v1353
        %1464 = vmatprep.subr.bf16.mxu0 0
        %1465 = vmatpush1.bf16.msra.mxu0 %v1354
        %1466 = vmatprep.subr.bf16.mxu0 0
        %1467 = vmatpush1.bf16.msra.mxu0 %v1355
        %1468 = vmatprep.mubr.bf16.mxu0 %v1405
        %1469 = vmatmul.mubr.bf16.gmra.mrb[0].mxu0 %v1404
        %v1470 = vpop.f32.mrb[0].mxu0
        %v1471 = vadd.f32 0.0, %v1470
        %v1472 = vpop.f32.mrb[0].mxu0
        %v1473 = vpop.f32.mrb[0].mxu0
        %v1474 = vadd.f32 0.0, %v1473
        %v1475 = vpop.f32.mrb[0].mxu0
        %1476 = vmatprep.mubr.bf16.mxu0 %v1407
        %1477 = vmatmul.mubr.bf16.gmra.mrb[0].mxu0 %v1406
        %v1478 = vpop.f32.mrb[0].mxu0
        %v1479 = vadd.f32 0.0, %v1478
        %v1480 = vpop.f32.mrb[0].mxu0
        %v1481 = vpop.f32.mrb[0].mxu0
        %v1482 = vadd.f32 0.0, %v1481
        %v1483 = vpop.f32.mrb[0].mxu0
        %1484 = vmatprep.mubr.bf16.mxu0 %v1409
        %1485 = vmatmul.mubr.bf16.gmra.mrb[0].mxu0 %v1408
        %v1486 = vpop.f32.mrb[0].mxu0
        %v1487 = vadd.f32 0.0, %v1486
        %v1488 = vpop.f32.mrb[0].mxu0
        %v1489 = vpop.f32.mrb[0].mxu0
        %v1490 = vadd.f32 0.0, %v1489
        %v1491 = vpop.f32.mrb[0].mxu0
        %1492 = vmatprep.mubr.bf16.mxu0 %v1411
        %1493 = vmatmul.mubr.bf16.gmra.mrb[0].mxu0 %v1410
        %v1494 = vpop.f32.mrb[0].mxu0
        %v1495 = vadd.f32 0.0, %v1494
        %v1496 = vpop.f32.mrb[0].mxu0
        %v1497 = vpop.f32.mrb[0].mxu0
        %v1498 = vadd.f32 0.0, %v1497
        %v1499 = vpop.f32.mrb[0].mxu0
        %1500 = vmatprep.mubr.bf16.mxu0 %v1413
        %1501 = vmatmul.mubr.bf16.gmra.mrb[0].mxu0 %v1412
        %v1502 = vpop.f32.mrb[0].mxu0
        %v1503 = vadd.f32 0.0, %v1502
        %v1504 = vpop.f32.mrb[0].mxu0
        %v1505 = vpop.f32.mrb[0].mxu0
        %v1506 = vadd.f32 0.0, %v1505
        %v1507 = vpop.f32.mrb[0].mxu0
        %1508 = vmatprep.mubr.bf16.mxu0 %v1415
        %1509 = vmatmul.mubr.bf16.gmra.mrb[0].mxu0 %v1414
        %v1510 = vpop.f32.mrb[0].mxu0
        %v1511 = vadd.f32 0.0, %v1510
        %v1512 = vpop.f32.mrb[0].mxu0
        %v1513 = vpop.f32.mrb[0].mxu0
        %v1514 = vadd.f32 0.0, %v1513
        %v1515 = vpop.f32.mrb[0].mxu0
        %1516 = vmatprep.mubr.bf16.mxu0 %v1417
        %1517 = vmatmul.mubr.bf16.gmra.mrb[0].mxu0 %v1416
        %v1518 = vpop.f32.mrb[0].mxu0
        %v1519 = vadd.f32 0.0, %v1518
        %v1520 = vpop.f32.mrb[0].mxu0
        %v1521 = vpop.f32.mrb[0].mxu0
        %v1522 = vadd.f32 0.0, %v1521
        %v1523 = vpop.f32.mrb[0].mxu0
        %1524 = vmatprep.mubr.bf16.mxu0 %v1419
        %1525 = vmatmul.mubr.bf16.gmra.mrb[0].mxu0 %v1418
        %v1526 = vpop.f32.mrb[0].mxu0
        %v1527 = vadd.f32 0.0, %v1526
        %v1528 = vpop.f32.mrb[0].mxu0
        %v1529 = vpop.f32.mrb[0].mxu0
        %v1530 = vadd.f32 0.0, %v1529
        %v1531 = vpop.f32.mrb[0].mxu0
        %1532 = vdwg.mxu0
        %v1549 = vunpack.c.l.b16 %v521
        %v1550 = vunpack.c.l.b16 %v522
        %v1551 = vunpack.c.l.b16 %v523
        %v1552 = vunpack.c.l.b16 %v524
        %v1553 = vunpack.c.l.b16 %v525
        %v1554 = vunpack.c.l.b16 %v526
        %v1555 = vunpack.c.l.b16 %v527
        %v1556 = vunpack.c.l.b16 %v528
        %v1557 = vunpack.c.l.b16 %v529
        %v1558 = vunpack.c.l.b16 %v530
        %v1559 = vunpack.c.l.b16 %v531
        %v1560 = vunpack.c.l.b16 %v532
        %v1561 = vunpack.c.l.b16 %v533
        %v1562 = vunpack.c.l.b16 %v534
        %v1563 = vunpack.c.l.b16 %v535
        %v1564 = vunpack.c.l.b16 %v536
        %v1565 = vpack.c.b16 %v1550, %v1549
        %v1566 = vpack.c.b16 %v1552, %v1551
        %v1567 = vpack.c.b16 %v1554, %v1553
        %v1568 = vpack.c.b16 %v1556, %v1555
        %v1569 = vpack.c.b16 %v1558, %v1557
        %v1570 = vpack.c.b16 %v1560, %v1559
        %v1571 = vpack.c.b16 %v1562, %v1561
        %v1572 = vpack.c.b16 %v1564, %v1563
        %v1574 = vsel %vm665, %v1565, 0
        %v1577 = vsel %vm665, %v1566, 0
        %v1580 = vsel %vm665, %v1567, 0
        %v1583 = vsel %vm665, %v1568, 0
        %v1586 = vsel %vm665, %v1569, 0
        %v1589 = vsel %vm665, %v1570, 0
        %v1592 = vsel %vm665, %v1571, 0
        %v1595 = vsel %vm665, %v1572, 0
        %1597 = vmatprep.subr.bf16.mxu0 0
        %1598 = vmatpush1.bf16.msra.mxu0 %v537
        %1599 = vmatprep.subr.bf16.mxu0 0
        %1600 = vmatpush1.bf16.msra.mxu0 %v538
        %1601 = vmatprep.subr.bf16.mxu0 0
        %1602 = vmatpush1.bf16.msra.mxu0 %v539
        %1603 = vmatprep.subr.bf16.mxu0 0
        %1604 = vmatpush1.bf16.msra.mxu0 %v540
        %1605 = vmatprep.subr.bf16.mxu0 0
        %1606 = vmatpush1.bf16.msra.mxu0 0
        %1607 = vmatprep.subr.bf16.mxu0 0
        %1608 = vmatpush1.bf16.msra.mxu0 0
        %1609 = vmatprep.subr.bf16.mxu0 0
        %1610 = vmatpush1.bf16.msra.mxu0 0
        %1611 = vmatprep.subr.bf16.mxu0 0
        %1612 = vmatpush1.bf16.msra.mxu0 0
        %1613 = vmatprep.subr.bf16.mxu0 0
        %1614 = vmatpush1.bf16.msra.mxu0 0
        %1615 = vmatprep.subr.bf16.mxu0 0
        %1616 = vmatpush1.bf16.msra.mxu0 0
        %1617 = vmatprep.subr.bf16.mxu0 0
        %1618 = vmatpush1.bf16.msra.mxu0 0
        %1619 = vmatprep.subr.bf16.mxu0 0
        %1620 = vmatpush1.bf16.msra.mxu0 0
        %1621 = vmatprep.subr.bf16.mxu0 0
        %1622 = vmatpush1.bf16.msra.mxu0 0
        %1623 = vmatprep.subr.bf16.mxu0 0
        %1624 = vmatpush1.bf16.msra.mxu0 0
        %1625 = vmatprep.subr.bf16.mxu0 0
        %1626 = vmatpush1.bf16.msra.mxu0 0
        %1627 = vmatprep.subr.bf16.mxu0 0
        %1628 = vmatpush1.bf16.msra.mxu0 0
        %1629 = vmatprep.mubr.bf16.mxu0 0
        %1630 = vmatmul.mubr.bf16.gmra.mrb[0].mxu0 %v1574
        %v1631 = vpop.f32.mrb[0].mxu0
        %v1632 = vadd.f32 %v1471, %v1631
        %v1633 = vpop.f32.mrb[0].mxu0
        %v1634 = vpop.f32.mrb[0].mxu0
        %v1635 = vadd.f32 %v1474, %v1634
        %v1636 = vpop.f32.mrb[0].mxu0
        %1637 = vmatprep.mubr.bf16.mxu0 0
        %1638 = vmatmul.mubr.bf16.gmra.mrb[0].mxu0 %v1577
        %v1639 = vpop.f32.mrb[0].mxu0
        %v1640 = vadd.f32 %v1479, %v1639
        %v1641 = vpop.f32.mrb[0].mxu0
        %v1642 = vpop.f32.mrb[0].mxu0
        %v1643 = vadd.f32 %v1482, %v1642
        %v1644 = vpop.f32.mrb[0].mxu0
        %1645 = vmatprep.mubr.bf16.mxu0 0
        %1646 = vmatmul.mubr.bf16.gmra.mrb[0].mxu0 %v1580
        %v1647 = vpop.f32.mrb[0].mxu0
        %v1648 = vadd.f32 %v1487, %v1647
        %v1649 = vpop.f32.mrb[0].mxu0
        %v1650 = vpop.f32.mrb[0].mxu0
        %v1651 = vadd.f32 %v1490, %v1650
        %v1652 = vpop.f32.mrb[0].mxu0
        %1653 = vmatprep.mubr.bf16.mxu0 0
        %1654 = vmatmul.mubr.bf16.gmra.mrb[0].mxu0 %v1583
        %v1655 = vpop.f32.mrb[0].mxu0
        %v1656 = vadd.f32 %v1495, %v1655
        %v1657 = vpop.f32.mrb[0].mxu0
        %v1658 = vpop.f32.mrb[0].mxu0
        %v1659 = vadd.f32 %v1498, %v1658
        %v1660 = vpop.f32.mrb[0].mxu0
        %1661 = vmatprep.mubr.bf16.mxu0 0
        %1662 = vmatmul.mubr.bf16.gmra.mrb[0].mxu0 %v1586
        %v1663 = vpop.f32.mrb[0].mxu0
        %v1664 = vadd.f32 %v1503, %v1663
        %v1665 = vpop.f32.mrb[0].mxu0
        %v1666 = vpop.f32.mrb[0].mxu0
        %v1667 = vadd.f32 %v1506, %v1666
        %v1668 = vpop.f32.mrb[0].mxu0
        %1669 = vmatprep.mubr.bf16.mxu0 0
        %1670 = vmatmul.mubr.bf16.gmra.mrb[0].mxu0 %v1589
        %v1671 = vpop.f32.mrb[0].mxu0
        %v1672 = vadd.f32 %v1511, %v1671
        %v1673 = vpop.f32.mrb[0].mxu0
        %v1674 = vpop.f32.mrb[0].mxu0
        %v1675 = vadd.f32 %v1514, %v1674
        %v1676 = vpop.f32.mrb[0].mxu0
        %1677 = vmatprep.mubr.bf16.mxu0 0
        %1678 = vmatmul.mubr.bf16.gmra.mrb[0].mxu0 %v1592
        %v1679 = vpop.f32.mrb[0].mxu0
        %v1680 = vadd.f32 %v1519, %v1679
        %v1681 = vpop.f32.mrb[0].mxu0
        %v1682 = vpop.f32.mrb[0].mxu0
        %v1683 = vadd.f32 %v1522, %v1682
        %v1684 = vpop.f32.mrb[0].mxu0
        %1685 = vmatprep.mubr.bf16.mxu0 0
        %1686 = vmatmul.mubr.bf16.gmra.mrb[0].mxu0 %v1595
        %v1687 = vpop.f32.mrb[0].mxu0
        %v1688 = vadd.f32 %v1527, %v1687
        %v1689 = vpop.f32.mrb[0].mxu0
        %v1690 = vpop.f32.mrb[0].mxu0
        %v1691 = vadd.f32 %v1530, %v1690
        %v1692 = vpop.f32.mrb[0].mxu0
        %1693 = vdwg.mxu0
        %1694 = vset.pattern.permute.xlu0 3
        %1695 = vperm.xlu0 %1694, %v240
        %v1696 = vpop.permute.xlu0 %1695
        %1698 = vset.pattern.permute.xlu0 3
        %1699 = vperm.xlu0 %1698, %v241
        %v1700 = vpop.permute.xlu0 %1699
        %1702 = vset.pattern.permute.xlu0 3
        %1703 = vperm.xlu0 %1702, %v242
        %v1704 = vpop.permute.xlu0 %1703
        %1706 = vset.pattern.permute.xlu0 3
        %1707 = vperm.xlu0 %1706, %v243
        %v1708 = vpop.permute.xlu0 %1707
        %1710 = vset.pattern.permute.xlu0 3
        %1711 = vperm.xlu0 %1710, %v244
        %v1712 = vpop.permute.xlu0 %1711
        %1714 = vset.pattern.permute.xlu0 3
        %1715 = vperm.xlu0 %1714, %v245
        %v1716 = vpop.permute.xlu0 %1715
        %1718 = vset.pattern.permute.xlu0 3
        %1719 = vperm.xlu0 %1718, %v246
        %v1720 = vpop.permute.xlu0 %1719
        %1722 = vset.pattern.permute.xlu0 3
        %1723 = vperm.xlu0 %1722, %v247
        %v1724 = vpop.permute.xlu0 %1723
        %1726 = vset.pattern.permute.xlu0 3
        %1727 = vperm.xlu0 %1726, %v248
        %v1728 = vpop.permute.xlu0 %1727
        %1730 = vset.pattern.permute.xlu0 3
        %1731 = vperm.xlu0 %1730, %v249
        %v1732 = vpop.permute.xlu0 %1731
        %1734 = vset.pattern.permute.xlu0 3
        %1735 = vperm.xlu0 %1734, %v250
        %v1736 = vpop.permute.xlu0 %1735
        %1738 = vset.pattern.permute.xlu0 3
        %1739 = vperm.xlu0 %1738, %v251
        %v1740 = vpop.permute.xlu0 %1739
        %1742 = vset.pattern.permute.xlu0 3
        %1743 = vperm.xlu0 %1742, %v252
        %v1744 = vpop.permute.xlu0 %1743
        %1746 = vset.pattern.permute.xlu0 3
        %1747 = vperm.xlu0 %1746, %v253
        %v1748 = vpop.permute.xlu0 %1747
        %1750 = vset.pattern.permute.xlu0 3
        %1751 = vperm.xlu0 %1750, %v254
        %v1752 = vpop.permute.xlu0 %1751
        %1754 = vset.pattern.permute.xlu0 3
        %1755 = vperm.xlu0 %1754, %v255
        %v1756 = vpop.permute.xlu0 %1755
        %v1758 = vadd.f32 %v1632, %v1696
        %v1759 = vadd.f32 %v1635, %v1700
        %v1760 = vadd.f32 %v1640, %v1704
        %v1761 = vadd.f32 %v1643, %v1708
        %v1762 = vadd.f32 %v1648, %v1712
        %v1763 = vadd.f32 %v1651, %v1716
        %v1764 = vadd.f32 %v1656, %v1720
        %v1765 = vadd.f32 %v1659, %v1724
        %v1766 = vadd.f32 %v1664, %v1728
        %v1767 = vadd.f32 %v1667, %v1732
        %v1768 = vadd.f32 %v1672, %v1736
        %v1769 = vadd.f32 %v1675, %v1740
        %v1770 = vadd.f32 %v1680, %v1744
        %v1771 = vadd.f32 %v1683, %v1748
        %v1772 = vadd.f32 %v1688, %v1752
        %v1773 = vadd.f32 %v1691, %v1756
        %v1774 = vmax.f32 %v1758, 0.0
        %v1775 = vmax.f32 %v1759, 0.0
        %v1776 = vmax.f32 %v1760, 0.0
        %v1777 = vmax.f32 %v1761, 0.0
        %v1778 = vmax.f32 %v1762, 0.0
        %v1779 = vmax.f32 %v1763, 0.0
        %v1780 = vmax.f32 %v1764, 0.0
        %v1781 = vmax.f32 %v1765, 0.0
        %v1782 = vmax.f32 %v1766, 0.0
        %v1783 = vmax.f32 %v1767, 0.0
        %v1784 = vmax.f32 %v1768, 0.0
        %v1785 = vmax.f32 %v1769, 0.0
        %v1786 = vmax.f32 %v1770, 0.0
        %v1787 = vmax.f32 %v1771, 0.0
        %v1788 = vmax.f32 %v1772, 0.0
        %v1789 = vmax.f32 %v1773, 0.0
        %v1790 = vld [vmem:[%s220] sm:$0x1]
        %v1791 = vld [vmem:[#allocation2 + $0x10] sm:$0xf]
        %v1792 = vld [vmem:[#allocation2 + $0x30] sm:$0xf]
        %v1793 = vld [vmem:[#allocation2 + $0x50] sm:$0xf]
        %v1794 = vld [vmem:[#allocation2 + $0x70] sm:$0xf]
        %v1795 = vld [vmem:[#allocation2 + $0x90] sm:$0xf]
        %v1796 = vld [vmem:[#allocation2 + $0xb0] sm:$0xf]
        %v1797 = vld [vmem:[#allocation2 + $0xd0] sm:$0xf]
        %v1798 = vld [vmem:[#allocation2 + $0xf0] sm:$0xf]
        %v1799 = vld [vmem:[#allocation2 + $0x110] sm:$0xf]
        %v1800 = vld [vmem:[#allocation2 + $0x130] sm:$0xf]
        %v1801 = vld [vmem:[#allocation2 + $0x150] sm:$0xf]
        %v1802 = vld [vmem:[#allocation2 + $0x170] sm:$0xf]
        %v1803 = vld [vmem:[#allocation2 + $0x190] sm:$0xf]
        %v1804 = vld [vmem:[#allocation2 + $0x1b0] sm:$0xf]
        %v1805 = vld [vmem:[#allocation2 + $0x1d0] sm:$0xf]
        %v1806 = vld [vmem:[#allocation2 + $0x1f0] sm:$0xf]
        %v1807 = vunpack.c.l.bf16 %v1791
        %v1808 = vunpack.c.l.bf16 %v1792
        %v1809 = vunpack.c.l.bf16 %v1793
        %v1810 = vunpack.c.l.bf16 %v1794
        %v1811 = vunpack.c.l.bf16 %v1795
        %v1812 = vunpack.c.l.bf16 %v1796
        %v1813 = vunpack.c.l.bf16 %v1797
        %v1814 = vunpack.c.l.bf16 %v1798
        %v1815 = vunpack.c.l.bf16 %v1799
        %v1816 = vunpack.c.l.bf16 %v1800
        %v1817 = vunpack.c.l.bf16 %v1801
        %v1818 = vunpack.c.l.bf16 %v1802
        %v1819 = vunpack.c.l.bf16 %v1803
        %v1820 = vunpack.c.l.bf16 %v1804
        %v1821 = vunpack.c.l.bf16 %v1805
        %v1822 = vunpack.c.l.bf16 %v1806
        %v1824 = vlaneseq
        %v1825 = vshrl.u32 %v1824, 7
        %v1826 = vsub.s32 0, %v1825
        %v1827 = vrot.slane %v1790, %v1826
        %v1829 = vmul.f32 %v1807, %v1827
        %v1830 = vmul.f32 %v1808, %v1827
        %v1831 = vmul.f32 %v1809, %v1827
        %v1832 = vmul.f32 %v1810, %v1827
        %v1833 = vmul.f32 %v1811, %v1827
        %v1834 = vmul.f32 %v1812, %v1827
        %v1835 = vmul.f32 %v1813, %v1827
        %v1836 = vmul.f32 %v1814, %v1827
        %v1837 = vmul.f32 %v1815, %v1827
        %v1838 = vmul.f32 %v1816, %v1827
        %v1839 = vmul.f32 %v1817, %v1827
        %v1840 = vmul.f32 %v1818, %v1827
        %v1841 = vmul.f32 %v1819, %v1827
        %v1842 = vmul.f32 %v1820, %v1827
        %v1843 = vmul.f32 %v1821, %v1827
        %v1844 = vmul.f32 %v1822, %v1827
        %1845 = vadd.xlane.f32.xlu0 %v1829
        %v1846 = vpop.xlane.xlu0 %1845
        %1847 = vadd.xlane.f32.xlu0 %v1830
        %v1848 = vpop.xlane.xlu0 %1847
        %1849 = vadd.xlane.f32.xlu0 %v1831
        %v1850 = vpop.xlane.xlu0 %1849
        %1851 = vadd.xlane.f32.xlu0 %v1832
        %v1852 = vpop.xlane.xlu0 %1851
        %1853 = vadd.xlane.f32.xlu0 %v1833
        %v1854 = vpop.xlane.xlu0 %1853
        %1855 = vadd.xlane.f32.xlu0 %v1834
        %v1856 = vpop.xlane.xlu0 %1855
        %1857 = vadd.xlane.f32.xlu0 %v1835
        %v1858 = vpop.xlane.xlu0 %1857
        %1859 = vadd.xlane.f32.xlu0 %v1836
        %v1860 = vpop.xlane.xlu0 %1859
        %1861 = vadd.xlane.f32.xlu0 %v1837
        %v1862 = vpop.xlane.xlu0 %1861
        %1863 = vadd.xlane.f32.xlu0 %v1838
        %v1864 = vpop.xlane.xlu0 %1863
        %1865 = vadd.xlane.f32.xlu0 %v1839
        %v1866 = vpop.xlane.xlu0 %1865
        %1867 = vadd.xlane.f32.xlu0 %v1840
        %v1868 = vpop.xlane.xlu0 %1867
        %1869 = vadd.xlane.f32.xlu0 %v1841
        %v1870 = vpop.xlane.xlu0 %1869
        %1871 = vadd.xlane.f32.xlu0 %v1842
        %v1872 = vpop.xlane.xlu0 %1871
        %1873 = vadd.xlane.f32.xlu0 %v1843
        %v1874 = vpop.xlane.xlu0 %1873
        %1875 = vadd.xlane.f32.xlu0 %v1844
        %v1876 = vpop.xlane.xlu0 %1875
        %v1877 = vld [vmem:[#allocation2 + $0xc] sm:$0xf]
        %v1878 = vld [vmem:[#allocation2 + $0x2c] sm:$0xf]
        %v1879 = vld [vmem:[#allocation2 + $0x4c] sm:$0xf]
        %v1880 = vld [vmem:[#allocation2 + $0x6c] sm:$0xf]
        %v1881 = vld [vmem:[#allocation2 + $0x8c] sm:$0xf]
        %v1882 = vld [vmem:[#allocation2 + $0xac] sm:$0xf]
        %v1883 = vld [vmem:[#allocation2 + $0xcc] sm:$0xf]
        %v1884 = vld [vmem:[#allocation2 + $0xec] sm:$0xf]
        %v1885 = vld [vmem:[#allocation2 + $0x10c] sm:$0xf]
        %v1886 = vld [vmem:[#allocation2 + $0x12c] sm:$0xf]
        %v1887 = vld [vmem:[#allocation2 + $0x14c] sm:$0xf]
        %v1888 = vld [vmem:[#allocation2 + $0x16c] sm:$0xf]
        %v1889 = vld [vmem:[#allocation2 + $0x18c] sm:$0xf]
        %v1890 = vld [vmem:[#allocation2 + $0x1ac] sm:$0xf]
        %v1891 = vld [vmem:[#allocation2 + $0x1cc] sm:$0xf]
        %v1892 = vld [vmem:[#allocation2 + $0x1ec] sm:$0xf]
        %v1893 = vpack.c.bf16 %v1775, %v1774
        %v1894 = vpack.c.bf16 %v1777, %v1776
        %v1895 = vpack.c.bf16 %v1779, %v1778
        %v1896 = vpack.c.bf16 %v1781, %v1780
        %v1897 = vpack.c.bf16 %v1783, %v1782
        %v1898 = vpack.c.bf16 %v1785, %v1784
        %v1899 = vpack.c.bf16 %v1787, %v1786
        %v1900 = vpack.c.bf16 %v1789, %v1788
        %v1917 = vunpack.c.l.b16 %v1877
        %v1918 = vunpack.c.l.b16 %v1878
        %v1919 = vunpack.c.l.b16 %v1879
        %v1920 = vunpack.c.l.b16 %v1880
        %v1921 = vunpack.c.l.b16 %v1881
        %v1922 = vunpack.c.l.b16 %v1882
        %v1923 = vunpack.c.l.b16 %v1883
        %v1924 = vunpack.c.l.b16 %v1884
        %v1925 = vunpack.c.l.b16 %v1885
        %v1926 = vunpack.c.l.b16 %v1886
        %v1927 = vunpack.c.l.b16 %v1887
        %v1928 = vunpack.c.l.b16 %v1888
        %v1929 = vunpack.c.l.b16 %v1889
        %v1930 = vunpack.c.l.b16 %v1890
        %v1931 = vunpack.c.l.b16 %v1891
        %v1932 = vunpack.c.l.b16 %v1892
        %v1933 = vpack.c.b16 %v1918, %v1917
        %v1934 = vpack.c.b16 %v1920, %v1919
        %v1935 = vpack.c.b16 %v1922, %v1921
        %v1936 = vpack.c.b16 %v1924, %v1923
        %v1937 = vpack.c.b16 %v1926, %v1925
        %v1938 = vpack.c.b16 %v1928, %v1927
        %v1939 = vpack.c.b16 %v1930, %v1929
        %v1940 = vpack.c.b16 %v1932, %v1931
        %1949 = vmatprep.subr.bf16.mxu0 0
        %1950 = vmatpush1.bf16.msra.mxu0 %v1893
        %1951 = vmatprep.subr.bf16.mxu0 0
        %1952 = vmatpush1.bf16.msra.mxu0 %v1894
        %1953 = vmatprep.subr.bf16.mxu0 0
        %1954 = vmatpush1.bf16.msra.mxu0 %v1895
        %1955 = vmatprep.subr.bf16.mxu0 0
        %1956 = vmatpush1.bf16.msra.mxu0 %v1896
        %1957 = vmatprep.subr.bf16.mxu0 0
        %1958 = vmatpush1.bf16.msra.mxu0 %v1897
        %1959 = vmatprep.subr.bf16.mxu0 0
        %1960 = vmatpush1.bf16.msra.mxu0 %v1898
        %1961 = vmatprep.subr.bf16.mxu0 0
        %1962 = vmatpush1.bf16.msra.mxu0 %v1899
        %1963 = vmatprep.subr.bf16.mxu0 0
        %1964 = vmatpush1.bf16.msra.mxu0 %v1900
        %1965 = vmatprep.subr.bf16.mxu0 0
        %1966 = vmatpush1.bf16.msra.mxu0 0
        %1967 = vmatprep.subr.bf16.mxu0 0
        %1968 = vmatpush1.bf16.msra.mxu0 0
        %1969 = vmatprep.subr.bf16.mxu0 0
        %1970 = vmatpush1.bf16.msra.mxu0 0
        %1971 = vmatprep.subr.bf16.mxu0 0
        %1972 = vmatpush1.bf16.msra.mxu0 0
        %1973 = vmatprep.subr.bf16.mxu0 0
        %1974 = vmatpush1.bf16.msra.mxu0 0
        %1975 = vmatprep.subr.bf16.mxu0 0
        %1976 = vmatpush1.bf16.msra.mxu0 0
        %1977 = vmatprep.subr.bf16.mxu0 0
        %1978 = vmatpush1.bf16.msra.mxu0 0
        %1979 = vmatprep.subr.bf16.mxu0 0
        %1980 = vmatpush1.bf16.msra.mxu0 0
        %1981 = vmatprep.mubr.bf16.mxu0 0
        %1982 = vmatmul.mubr.bf16.gmra.mrb[0].mxu0 %v1933
        %v1983 = vpop.f32.mrb[0].mxu0
        %v1984 = vadd.f32 %v1846, %v1983
        %v1985 = vpop.f32.mrb[0].mxu0
        %v1986 = vpop.f32.mrb[0].mxu0
        %v1987 = vadd.f32 %v1848, %v1986
        %v1988 = vpop.f32.mrb[0].mxu0
        %1989 = vmatprep.mubr.bf16.mxu0 0
        %1990 = vmatmul.mubr.bf16.gmra.mrb[0].mxu0 %v1934
        %v1991 = vpop.f32.mrb[0].mxu0
        %v1992 = vadd.f32 %v1850, %v1991
        %v1993 = vpop.f32.mrb[0].mxu0
        %v1994 = vpop.f32.mrb[0].mxu0
        %v1995 = vadd.f32 %v1852, %v1994
        %v1996 = vpop.f32.mrb[0].mxu0
        %1997 = vmatprep.mubr.bf16.mxu0 0
        %1998 = vmatmul.mubr.bf16.gmra.mrb[0].mxu0 %v1935
        %v1999 = vpop.f32.mrb[0].mxu0
        %v2000 = vadd.f32 %v1854, %v1999
        %v2001 = vpop.f32.mrb[0].mxu0
        %v2002 = vpop.f32.mrb[0].mxu0
        %v2003 = vadd.f32 %v1856, %v2002
        %v2004 = vpop.f32.mrb[0].mxu0
        %2005 = vmatprep.mubr.bf16.mxu0 0
        %2006 = vmatmul.mubr.bf16.gmra.mrb[0].mxu0 %v1936
        %v2007 = vpop.f32.mrb[0].mxu0
        %v2008 = vadd.f32 %v1858, %v2007
        %v2009 = vpop.f32.mrb[0].mxu0
        %v2010 = vpop.f32.mrb[0].mxu0
        %v2011 = vadd.f32 %v1860, %v2010
        %v2012 = vpop.f32.mrb[0].mxu0
        %2013 = vmatprep.mubr.bf16.mxu0 0
        %2014 = vmatmul.mubr.bf16.gmra.mrb[0].mxu0 %v1937
        %v2015 = vpop.f32.mrb[0].mxu0
        %v2016 = vadd.f32 %v1862, %v2015
        %v2017 = vpop.f32.mrb[0].mxu0
        %v2018 = vpop.f32.mrb[0].mxu0
        %v2019 = vadd.f32 %v1864, %v2018
        %v2020 = vpop.f32.mrb[0].mxu0
        %2021 = vmatprep.mubr.bf16.mxu0 0
        %2022 = vmatmul.mubr.bf16.gmra.mrb[0].mxu0 %v1938
        %v2023 = vpop.f32.mrb[0].mxu0
        %v2024 = vadd.f32 %v1866, %v2023
        %v2025 = vpop.f32.mrb[0].mxu0
        %v2026 = vpop.f32.mrb[0].mxu0
        %v2027 = vadd.f32 %v1868, %v2026
        %v2028 = vpop.f32.mrb[0].mxu0
        %2029 = vmatprep.mubr.bf16.mxu0 0
        %2030 = vmatmul.mubr.bf16.gmra.mrb[0].mxu0 %v1939
        %v2031 = vpop.f32.mrb[0].mxu0
        %v2032 = vadd.f32 %v1870, %v2031
        %v2033 = vpop.f32.mrb[0].mxu0
        %v2034 = vpop.f32.mrb[0].mxu0
        %v2035 = vadd.f32 %v1872, %v2034
        %v2036 = vpop.f32.mrb[0].mxu0
        %2037 = vmatprep.mubr.bf16.mxu0 0
        %2038 = vmatmul.mubr.bf16.gmra.mrb[0].mxu0 %v1940
        %v2039 = vpop.f32.mrb[0].mxu0
        %v2040 = vadd.f32 %v1874, %v2039
        %v2041 = vpop.f32.mrb[0].mxu0
        %v2042 = vpop.f32.mrb[0].mxu0
        %v2043 = vadd.f32 %v1876, %v2042
        %v2044 = vpop.f32.mrb[0].mxu0
        %2045 = vdwg.mxu0
        %2046 = vset.pattern.permute.xlu0 4
        %2047 = vperm.xlu0 %2046, %v240
        %v2048 = vpop.permute.xlu0 %2047
        %2050 = vset.pattern.permute.xlu0 4
        %2051 = vperm.xlu0 %2050, %v241
        %v2052 = vpop.permute.xlu0 %2051
        %2054 = vset.pattern.permute.xlu0 4
        %2055 = vperm.xlu0 %2054, %v242
        %v2056 = vpop.permute.xlu0 %2055
        %2058 = vset.pattern.permute.xlu0 4
        %2059 = vperm.xlu0 %2058, %v243
        %v2060 = vpop.permute.xlu0 %2059
        %2062 = vset.pattern.permute.xlu0 4
        %2063 = vperm.xlu0 %2062, %v244
        %v2064 = vpop.permute.xlu0 %2063
        %2066 = vset.pattern.permute.xlu0 4
        %2067 = vperm.xlu0 %2066, %v245
        %v2068 = vpop.permute.xlu0 %2067
        %2070 = vset.pattern.permute.xlu0 4
        %2071 = vperm.xlu0 %2070, %v246
        %v2072 = vpop.permute.xlu0 %2071
        %2074 = vset.pattern.permute.xlu0 4
        %2075 = vperm.xlu0 %2074, %v247
        %v2076 = vpop.permute.xlu0 %2075
        %2078 = vset.pattern.permute.xlu0 4
        %2079 = vperm.xlu0 %2078, %v248
        %v2080 = vpop.permute.xlu0 %2079
        %2082 = vset.pattern.permute.xlu0 4
        %2083 = vperm.xlu0 %2082, %v249
        %v2084 = vpop.permute.xlu0 %2083
        %2086 = vset.pattern.permute.xlu0 4
        %2087 = vperm.xlu0 %2086, %v250
        %v2088 = vpop.permute.xlu0 %2087
        %2090 = vset.pattern.permute.xlu0 4
        %2091 = vperm.xlu0 %2090, %v251
        %v2092 = vpop.permute.xlu0 %2091
        %2094 = vset.pattern.permute.xlu0 4
        %2095 = vperm.xlu0 %2094, %v252
        %v2096 = vpop.permute.xlu0 %2095
        %2098 = vset.pattern.permute.xlu0 4
        %2099 = vperm.xlu0 %2098, %v253
        %v2100 = vpop.permute.xlu0 %2099
        %2102 = vset.pattern.permute.xlu0 4
        %2103 = vperm.xlu0 %2102, %v254
        %v2104 = vpop.permute.xlu0 %2103
        %2106 = vset.pattern.permute.xlu0 4
        %2107 = vperm.xlu0 %2106, %v255
        %v2108 = vpop.permute.xlu0 %2107
        %v2110 = vadd.f32 %v1984, %v2048
        %v2111 = vadd.f32 %v1987, %v2052
        %v2112 = vadd.f32 %v1992, %v2056
        %v2113 = vadd.f32 %v1995, %v2060
        %v2114 = vadd.f32 %v2000, %v2064
        %v2115 = vadd.f32 %v2003, %v2068
        %v2116 = vadd.f32 %v2008, %v2072
        %v2117 = vadd.f32 %v2011, %v2076
        %v2118 = vadd.f32 %v2016, %v2080
        %v2119 = vadd.f32 %v2019, %v2084
        %v2120 = vadd.f32 %v2024, %v2088
        %v2121 = vadd.f32 %v2027, %v2092
        %v2122 = vadd.f32 %v2032, %v2096
        %v2123 = vadd.f32 %v2035, %v2100
        %v2124 = vadd.f32 %v2040, %v2104
        %v2125 = vadd.f32 %v2043, %v2108
        %v2126 = vmax.f32 %v2110, 0.0
        %v2127 = vmax.f32 %v2111, 0.0
        %v2128 = vmax.f32 %v2112, 0.0
        %v2129 = vmax.f32 %v2113, 0.0
        %v2130 = vmax.f32 %v2114, 0.0
        %v2131 = vmax.f32 %v2115, 0.0
        %v2132 = vmax.f32 %v2116, 0.0
        %v2133 = vmax.f32 %v2117, 0.0
        %v2134 = vmax.f32 %v2118, 0.0
        %v2135 = vmax.f32 %v2119, 0.0
        %v2136 = vmax.f32 %v2120, 0.0
        %v2137 = vmax.f32 %v2121, 0.0
        %v2138 = vmax.f32 %v2122, 0.0
        %v2139 = vmax.f32 %v2123, 0.0
        %v2140 = vmax.f32 %v2124, 0.0
        %v2141 = vmax.f32 %v2125, 0.0
        %2142 = vset.pattern.permute.xlu0 6
        %2143 = vperm.xlu0 %2142, %v240
        %v2144 = vpop.permute.xlu0 %2143
        %2146 = vset.pattern.permute.xlu0 6
        %2147 = vperm.xlu0 %2146, %v241
        %v2148 = vpop.permute.xlu0 %2147
        %2150 = vset.pattern.permute.xlu0 6
        %2151 = vperm.xlu0 %2150, %v242
        %v2152 = vpop.permute.xlu0 %2151
        %2154 = vset.pattern.permute.xlu0 6
        %2155 = vperm.xlu0 %2154, %v243
        %v2156 = vpop.permute.xlu0 %2155
        %2158 = vset.pattern.permute.xlu0 6
        %2159 = vperm.xlu0 %2158, %v244
        %v2160 = vpop.permute.xlu0 %2159
        %2162 = vset.pattern.permute.xlu0 6
        %2163 = vperm.xlu0 %2162, %v245
        %v2164 = vpop.permute.xlu0 %2163
        %2166 = vset.pattern.permute.xlu0 6
        %2167 = vperm.xlu0 %2166, %v246
        %v2168 = vpop.permute.xlu0 %2167
        %2170 = vset.pattern.permute.xlu0 6
        %2171 = vperm.xlu0 %2170, %v247
        %v2172 = vpop.permute.xlu0 %2171
        %2174 = vset.pattern.permute.xlu0 6
        %2175 = vperm.xlu0 %2174, %v248
        %v2176 = vpop.permute.xlu0 %2175
        %2178 = vset.pattern.permute.xlu0 6
        %2179 = vperm.xlu0 %2178, %v249
        %v2180 = vpop.permute.xlu0 %2179
        %2182 = vset.pattern.permute.xlu0 6
        %2183 = vperm.xlu0 %2182, %v250
        %v2184 = vpop.permute.xlu0 %2183
        %2186 = vset.pattern.permute.xlu0 6
        %2187 = vperm.xlu0 %2186, %v251
        %v2188 = vpop.permute.xlu0 %2187
        %2190 = vset.pattern.permute.xlu0 6
        %2191 = vperm.xlu0 %2190, %v252
        %v2192 = vpop.permute.xlu0 %2191
        %2194 = vset.pattern.permute.xlu0 6
        %2195 = vperm.xlu0 %2194, %v253
        %v2196 = vpop.permute.xlu0 %2195
        %2198 = vset.pattern.permute.xlu0 6
        %2199 = vperm.xlu0 %2198, %v254
        %v2200 = vpop.permute.xlu0 %2199
        %2202 = vset.pattern.permute.xlu0 6
        %2203 = vperm.xlu0 %2202, %v255
        %v2204 = vpop.permute.xlu0 %2203
        %v2206 = vmul.f32 %v2126, %v2144
        %v2207 = vmul.f32 %v2127, %v2148
        %v2208 = vmul.f32 %v2128, %v2152
        %v2209 = vmul.f32 %v2129, %v2156
        %v2210 = vmul.f32 %v2130, %v2160
        %v2211 = vmul.f32 %v2131, %v2164
        %v2212 = vmul.f32 %v2132, %v2168
        %v2213 = vmul.f32 %v2133, %v2172
        %v2214 = vmul.f32 %v2134, %v2176
        %v2215 = vmul.f32 %v2135, %v2180
        %v2216 = vmul.f32 %v2136, %v2184
        %v2217 = vmul.f32 %v2137, %v2188
        %v2218 = vmul.f32 %v2138, %v2192
        %v2219 = vmul.f32 %v2139, %v2196
        %v2220 = vmul.f32 %v2140, %v2200
        %v2221 = vmul.f32 %v2141, %v2204
        %v2222 = vsel %vm665, %v2206, 0.0
        %v2223 = vsel %vm665, %v2207, 0.0
        %v2224 = vadd.f32 %v2222, %v2223
        %v2225 = vsel %vm665, %v2208, 0.0
        %v2226 = vadd.f32 %v2224, %v2225
        %v2227 = vsel %vm665, %v2209, 0.0
        %v2228 = vadd.f32 %v2226, %v2227
        %v2229 = vsel %vm665, %v2210, 0.0
        %v2230 = vadd.f32 %v2228, %v2229
        %v2231 = vsel %vm665, %v2211, 0.0
        %v2232 = vadd.f32 %v2230, %v2231
        %v2233 = vsel %vm665, %v2212, 0.0
        %v2234 = vadd.f32 %v2232, %v2233
        %v2235 = vsel %vm665, %v2213, 0.0
        %v2236 = vadd.f32 %v2234, %v2235
        %v2237 = vsel %vm665, %v2214, 0.0
        %v2238 = vadd.f32 %v2236, %v2237
        %v2239 = vsel %vm665, %v2215, 0.0
        %v2240 = vadd.f32 %v2238, %v2239
        %v2241 = vsel %vm665, %v2216, 0.0
        %v2242 = vadd.f32 %v2240, %v2241
        %v2243 = vsel %vm665, %v2217, 0.0
        %v2244 = vadd.f32 %v2242, %v2243
        %v2245 = vsel %vm665, %v2218, 0.0
        %v2246 = vadd.f32 %v2244, %v2245
        %v2247 = vsel %vm665, %v2219, 0.0
        %v2248 = vadd.f32 %v2246, %v2247
        %v2249 = vsel %vm665, %v2220, 0.0
        %v2250 = vadd.f32 %v2248, %v2249
        %v2251 = vsel %vm665, %v2221, 0.0
        %v2252 = vadd.f32 %v2250, %v2251
        %v2253 = vrot.slane %v2252, 4
        %v2254 = vadd.f32 %v2252, %v2253
        %v2255 = vrot.slane %v2254, 2
        %v2256 = vadd.f32 %v2254, %v2255
        %v2257 = vrot.slane %v2256, 1
        %v2258 = vadd.f32 %v2256, %v2257
        %v2259 = vld [vmem:[%s3] sm:$0x1]
        %2261 = vset.pattern.permute.xlu0 5
        %2262 = vperm.xlu0 %2261, %v2259
        %v2263 = vpop.permute.xlu0 %2262
        %v2265 = vadd.f32 %v2258, %v2263
        %vm2266 = vcmask 518144
        %v2267 = vsel %vm2266, %v222, 0.0
        %v2268 = vrot.slane %v2267, 4
        %v2269 = vadd.f32 %v2267, %v2268
        %v2270 = vrot.slane %v2269, 2
        %v2271 = vadd.f32 %v2269, %v2270
        %v2272 = vrot.slane %v2271, 1
        %v2273 = vadd.f32 %v2271, %v2272
        %vm2274 = vcmp.eq.f32.partialorder %v2273, 0.0
        %v2275 = vsel %vm2274, -1e+08, %v2265
        %vm2276 = vcmask 516096
        %v2277 = vsel %vm2276, %v2275, -inf
        %2278 = vmax.xlane.f32.xlu0 %v2277
        %v2279 = vpop.xlane.xlu0 %2278
        %v2280 = vsub.f32 %v2275, %v2279
        %v2281 = vmul.f32 %v2280, 1.442695
        %v2282 = vpow.pop %v2281
        %v2283 = vsel %vm2276, %v2282, 0.0
        %2284 = vadd.xlane.f32.xlu0 %v2283
        %v2285 = vpop.xlane.xlu0 %2284
        %v2286 = vlog2.pop %v2285
        %v2287 = vmul.f32 %v2286, 0.6931472
        %v2288 = vsub.f32 %v2280, %v2287
        %2289 = vst.msk [vmem:[%s213] sm:$0x1] %vm2276, %v2288
        %s2290 = sand.u32 %s121, 1
        %s2291 = scalar_lea.sflag [#allocation4], %s2290
        %s2292 = sand.u32 %s121, 1
        %s2293 = scalar_lea.vmem [#allocation5], %s2292
        // Predicated region
        $region41: #{fwd.1} parent=35 // pred_check
          %p2294 = pneg %p131
        $region42: #{fwd.1} parent=35 // pred_check_branch
          %2296 = sbr.rel (%p2294) target = $region44
        $region43: #{fwd.1} parent=35 // pred_region
          %s2298 = ssub.s32 16, 16
          %2299 = vsyncadd %s2291, %s2298
          %s2300 = smul.addr %s19, 16
          %s2301 = scalar_lea.hbm %s4, %s2300
          %s2303 = sshll.u32 %s2293, 4
          %s2304 = int_to_ptr.vmem [resolvable:$true] %s2303
          %2306 = dma.vmem_to_hbm [thread:$0]  %s2304, 16, %s2301, %s2291
        $region44: #{fwd.1} parent=35 // pred_fallthru
          _
      $region36: #{fwd.1} parent=5 // pred_fallthru
        _
      %p2307 = scmp.le.s32.totalorder 2, %s14
      // Predicated region
      $region45: #{fwd.1} parent=5 // pred_check
        %p2308 = pneg %p2307
      $region46: #{fwd.1} parent=5 // pred_check_branch
        %2310 = sbr.rel (%p2308) target = $region48
      $region47: #{fwd.1} parent=5 // pred_region
        %s2311 = ssub.s32 %s14, 2
        // Predicated region
        $region49: #{fwd.1} parent=47 // pred_check
          %p2312 = pneg %p137
        $region50: #{fwd.1} parent=47 // pred_check_branch
          %2314 = sbr.rel (%p2312) target = $region52
        $region51: #{fwd.1} parent=47 // pred_region
          %s2315 = sand.u32 %s122, 1
          %s2316 = scalar_lea.sflag [#allocation4], %s2315
          %s2317 = sand.u32 %s122, 1
          %s2318 = scalar_lea.vmem [#allocation5], %s2317
          %2319 = dma.done %s2316, 16
        $region52: #{fwd.1} parent=47 // pred_fallthru
          _
      $region48: #{fwd.1} parent=5 // pred_fallthru
        _
    $region6: #{fwd.1} parent=1 // loop_footer
      %s18 = sadd.s32 1, %s14
    $region7: #{fwd.1} parent=1 // loop_footer_branch
      %13 = sbr.rel target = $region3
    $region8: #{fwd.1} parent=1 // loop_exit
      _
    %2320 = vsyncpa [#allocation3], 1
    %s2321 = scalar_lea.sflag [#allocation3], 1
    %2322 = vsyncpa %s2321, 1
    %2323 = vsyncpa [#allocation4], 1
    %s2324 = scalar_lea.sflag [#allocation4], 1
    %2325 = vsyncpa %s2324, 1

</llo_original>
